<compile_context>
chip_gen: v7x
topology: tpu7x:2x2x1
jax: 0.10.0
libtpu: 0.0.40
codegen_flags: <defaults>
</compile_context>

<pallas_src>
import jax
import jax.numpy as jnp
from jax.experimental import pallas as pl
from jax.experimental.pallas import tpu as pltpu

# Fixed hidden sizes from the PyTorch module.
H1, H2, H3, OUT = 1024, 512, 256, 1


def _round_up(x, m):
    return ((x + m - 1) // m) * m


def _default_epilogue_dtype():
    """bf16 epilogues only where the VPU is bf16-capable (v6e / v7x); f32 otherwise."""
    try:
        kind = jax.devices()[0].device_kind.lower()
    except Exception:
        return jnp.float32
    if ("v6" in kind) or ("v7" in kind) or ("tpu7" in kind):
        return jnp.bfloat16
    return jnp.float32


# --------------------------------------------------------------------------- #
# Kernel
# --------------------------------------------------------------------------- #
def _mlp_kernel(x_ref, w1_ref, b1_ref, w2_ref, b2_ref, w34_ref, b34_ref, out_ref):
    ep = b1_ref.dtype  # epilogue dtype: f32 (v5e) or bf16 (v6e/v7x); compile-time

    # fc1 + ReLU.  x is streamed f32 and cast here (no wrapper-side HBM pass).
    x = x_ref[...].astype(jnp.bfloat16)
    h = jnp.dot(x, w1_ref[...], preferred_element_type=jnp.float32)
    h = jnp.maximum(h.astype(ep) + b1_ref[...], 0.0).astype(jnp.bfloat16)

    # fc2 + ReLU  (dropout layers are identity in inference mode).
    h = jnp.dot(h, w2_ref[...], preferred_element_type=jnp.float32)
    h = jnp.maximum(h.astype(ep) + b2_ref[...], 0.0)

    # Fused fc3 + out (512 -> 1): exact since there is no nonlinearity between
    # them.  VPU multiply + f32 lane reduction; then relayout the (tb,1) column
    # into a lane-dense (1,tb) row so the output store is a full-width vst.
    prod = h * w34_ref[...]
    col = jnp.sum(prod.astype(jnp.float32), axis=-1, keepdims=True)   # (tb, 1) f32
    row = jnp.transpose(col, (1, 0)) + b34_ref[...]                    # (1, tb)
    out_ref[...] = row.astype(out_ref.dtype)


# --------------------------------------------------------------------------- #
# pallas_call wrapper
# --------------------------------------------------------------------------- #
def _pallas_forward(x, w1, b1, w2, b2, w34, b34, *, tb, single_buffer_weights):
    Bp, Kp = x.shape
    grid = (Bp // tb,)

    if single_buffer_weights:
        # Grid-invariant operands: one VMEM buffer is enough (fetched once).
        def wspec(shape):
            return pl.BlockSpec(shape, lambda i: (0, 0), pipeline_mode=pl.Buffered(1))
    else:
        def wspec(shape):
            return pl.BlockSpec(shape, lambda i: (0, 0))

    bias_bytes = jnp.dtype(b1.dtype).itemsize
    bytes_accessed = (Bp * Kp * 4                                  # x (f32, cast in kernel)
                      + Kp * H1 * 2 + H1 * H2 * 2                  # w1, w2 (bf16)
                      + (H1 + H2 + H2) * bias_bytes + OUT * 4      # b1, b2, w34, b34
                      + Bp * OUT * 4)                              # output
    cost = pl.CostEstimate(
        flops=2 * Bp * (Kp * H1 + H1 * H2 + H2),
        transcendentals=0,
        bytes_accessed=bytes_accessed,
    )

    # VMEM guard: only relevant if n_desc (hence Kp) is large; mainly v5e's
    # 16 MiB default scoped VMEM.
    nbuf = 1 if single_buffer_weights else 2
    vmem_est = (2 * tb * Kp * 4 + 2 * tb * 4
                + nbuf * (Kp * H1 * 2 + H1 * H2 * 2 + (H1 + 2 * H2 + OUT) * 4)
                + 2 * tb * (H1 + H2) * 4)
    vmem_limit = None
    if vmem_est > 12 * 1024 * 1024:
        vmem_limit = min(int(vmem_est * 3 // 2), 100 * 1024 * 1024)

    return pl.pallas_call(
        _mlp_kernel,
        out_shape=jax.ShapeDtypeStruct((Bp // tb, tb), jnp.float32),
        grid_spec=pltpu.PrefetchScalarGridSpec(
            num_scalar_prefetch=0,
            grid=grid,
            in_specs=[
                pl.BlockSpec((tb, Kp), lambda i: (i, 0)),   # x tile (pipelined)
                wspec((Kp, H1)), wspec((1, H1)),            # fc1
                wspec((H1, H2)), wspec((1, H2)),            # fc2
                wspec((1, H2)),  wspec((1, OUT)),           # fused fc3 + out
            ],
            out_specs=pl.BlockSpec((1, tb), lambda i: (i, 0)),   # lane-dense rows
        ),
        compiler_params=pltpu.CompilerParams(
            dimension_semantics=("parallel",),
            vmem_limit_bytes=vmem_limit),
        cost_estimate=cost,
    )(x, w1, b1, w2, b2, w34, b34)


# --------------------------------------------------------------------------- #
# Parameter prep (hoist out of the per-call path) + public entry point
# --------------------------------------------------------------------------- #
def prepare_params(params, n_desc, *, epilogue_dtype=None):
    """One-time parameter prep: fc3+out fusion, K-padding of w1, bf16 weight
    casts, epilogue-dtype biases.  Cache the returned dict and reuse it."""
    if epilogue_dtype is None:
        epilogue_dtype = _default_epilogue_dtype()
    w1, b1, w2, b2, w3, b3, wo, bo = params

    hp = jax.lax.Precision.HIGHEST
    # (h @ w3 + b3) @ wo + bo  ==  h @ (w3 @ wo) + (b3 @ wo + bo)   (exact fusion)
    w34 = jnp.dot(w3, wo, precision=hp,
                  preferred_element_type=jnp.float32).reshape(1, H2)
    b34 = (jnp.dot(b3.reshape(1, H3), wo, precision=hp,
                   preferred_element_type=jnp.float32)
           + bo.reshape(1, OUT)).reshape(1, OUT)

    Kp = _round_up(n_desc, 128)
    if Kp != n_desc:                      # extra zero rows keep the matmul exact
        w1 = jnp.pad(w1, ((0, Kp - n_desc), (0, 0)))

    return {
        "n_desc": int(n_desc), "Kp": int(Kp),
        "w1": w1.astype(jnp.bfloat16),
        "b1": b1.reshape(1, H1).astype(epilogue_dtype),
        "w2": w2.astype(jnp.bfloat16),
        "b2": b2.reshape(1, H2).astype(epilogue_dtype),
        "w34": w34.astype(epilogue_dtype),
        "b34": b34.astype(jnp.float32),
    }


def _choose_tile(B):
    B16 = max(16, _round_up(B, 16))
    if B16 <= 256:
        return B16                        # single step; weight DMA dominates here
    # Keep >= 2 grid steps so v7x megacore can shard the batch; tiles up to 512.
    return min(512, _round_up((B16 + 1) // 2, 16))


def descriptor_encoder(fp, params, *, tb=None):
    """fp: [B, n_descriptors] float32 -> [B, 1] float32 (inference-mode forward).

    `params` is either the raw tuple from init_params (prepped on the fly) or,
    preferably, the cached dict from prepare_params (prep hoisted off the call path).
    """
    B, n_desc = fp.shape
    if not isinstance(params, dict):
        params = prepare_params(params, n_desc)
    assert params["n_desc"] == n_desc, "params prepared for a different n_descriptors"
    Kp = params["Kp"]

    if fp.dtype != jnp.float32:
        fp = fp.astype(jnp.float32)
    if Kp != n_desc:                      # exact: padded x columns hit zero w1 rows
        fp = jnp.pad(fp, ((0, 0), (0, Kp - n_desc)))

    if tb is None:
        tb = _choose_tile(B)
    tb = max(16, _round_up(tb, 16))
    Bp = _round_up(B, tb)
    if Bp != B:
        fp = jnp.pad(fp, ((0, Bp - B), (0, 0)))

    args = (fp, params["w1"], params["b1"], params["w2"], params["b2"],
            params["w34"], params["b34"])
    try:
        out = _pallas_forward(*args, tb=tb, single_buffer_weights=True)
    except (TypeError, ValueError, NotImplementedError, pltpu.LoweringException):
        # Only hit if this JAX build rejects pipeline_mode=pl.Buffered(1); the
        # fallback differs solely by one extra (unused) VMEM buffer per weight.
        # A genuine error would re-raise from the fallback path (nothing is hidden).
        out = _pallas_forward(*args, tb=tb, single_buffer_weights=False)

    # (grid, tb) lane-dense rows -> (B, 1) column.
    return out.reshape(Bp, 1)[:B]


# --------------------------------------------------------------------------- #
# Init + reference
# --------------------------------------------------------------------------- #
def init_params(key, n_desc):
    """Deterministic init matching PyTorch Linear default (uniform +-1/sqrt(fan_in))."""
    def linear(k, fan_in, fan_out):
        kw, kb = jax.random.split(k)
        bound = 1.0 / jnp.sqrt(fan_in)
        w = jax.random.uniform(kw, (fan_in, fan_out), jnp.float32, -bound, bound)
        b = jax.random.uniform(kb, (1, fan_out), jnp.float32, -bound, bound)
        return w, b

    k1, k2, k3, k4 = jax.random.split(key, 4)
    w1, b1 = linear(k1, n_desc, H1)
    w2, b2 = linear(k2, H1, H2)
    w3, b3 = linear(k3, H2, H3)
    wo, bo = linear(k4, H3, OUT)
    return (w1, b1, w2, b2, w3, b3, wo, bo)


def reference(fp, params, *, epilogue_dtype=jnp.float32):
    """Pure-JAX reference mirroring the kernel numerics (bf16 dot inputs, f32 MXU
    accumulation, epilogue in `epilogue_dtype`), with an UNfused fc3/out tail.
    Pure-f32 PyTorch parity is within ~1%."""
    w1, b1, w2, b2, w3, b3, wo, bo = params
    bf = lambda a: a.astype(jnp.bfloat16)
    ep = epilogue_dtype
    h = jnp.dot(bf(fp), bf(w1), preferred_element_type=jnp.float32)
    h = jnp.maximum(h.astype(ep) + b1.astype(ep), 0.0)
    h = jnp.dot(bf(h), bf(w2), preferred_element_type=jnp.float32)
    h = jnp.maximum(h.astype(ep) + b2.astype(ep), 0.0)
    e = jnp.dot(bf(h), bf(w3), preferred_element_type=jnp.float32) + b3
    return jnp.dot(bf(e), bf(wo), preferred_element_type=jnp.float32) + bo


if __name__ == "__main__":
    key = jax.random.PRNGKey(0)
    k_x, k_p = jax.random.split(key)

    # Small synthetic shapes; n_desc=70 / B=80 exercise both padding paths.
    B, n_desc = 80, 70
    fp = jax.random.normal(k_x, (B, n_desc), dtype=jnp.float32)
    params = init_params(k_p, n_desc)

    ep = _default_epilogue_dtype()
    ref = reference(fp, params, epilogue_dtype=ep)

    # Hoisted parameter prep (done once, reused across calls).
    prepped = prepare_params(params, n_desc)

    # Default (single-step, large) batch tile.
    out = jax.block_until_ready(descriptor_encoder(fp, prepped))
    assert out.shape == (B, OUT)
    assert jnp.allclose(out, ref, atol=2e-2, rtol=2e-2), "mismatch (default tile)"

    # Small explicit tile -> multi-step grid + batch-padding path.
    out2 = jax.block_until_ready(descriptor_encoder(fp, prepped, tb=32))
    assert out2.shape == (B, OUT)
    assert jnp.allclose(out2, ref, atol=2e-2, rtol=2e-2), "mismatch (tb=32)"

    # Larger batch: exercises the >=2-step megacore-friendly tile choice and the
    # raw-params (prep-on-the-fly) convenience path.
    B2 = 600
    fp2 = jax.random.normal(k_x, (B2, n_desc), dtype=jnp.float32)
    ref2 = reference(fp2, params, epilogue_dtype=ep)
    out3 = jax.block_until_ready(descriptor_encoder(fp2, params))
    assert out3.shape == (B2, OUT)
    assert jnp.allclose(out3, ref2, atol=2e-2, rtol=2e-2), "mismatch (large batch)"

    print("KERNEL_OK")
</pallas_src>

<mosaic_0001>
module attributes {stable_mosaic.version = 11 : i64} {
  func.func @_mlp_kernel(%arg0: i32, %arg1: memref<80x128xf32, #tpu.memory_space<vmem>>, %arg2: memref<128x1024xbf16, #tpu.memory_space<vmem>>, %arg3: memref<1x1024xf32, #tpu.memory_space<vmem>>, %arg4: memref<1024x512xbf16, #tpu.memory_space<vmem>>, %arg5: memref<1x512xf32, #tpu.memory_space<vmem>>, %arg6: memref<1x512xf32, #tpu.memory_space<vmem>>, %arg7: memref<1x1xf32, #tpu.memory_space<vmem>>, %arg8: memref<1x80xf32, #tpu.memory_space<vmem>>) attributes {dimension_semantics = [#tpu.dimension_semantics<parallel>], iteration_bounds = array<i64: 1>, scalar_prefetch = 0 : i64, scratch_operands = 0 : i64, tpu.core_type = #tpu.core_type<tc>, window_params = [{transform_indices = @transform_0, window_bounds = array<i64: 80, 128>}, {pipeline_mode = #tpu.pipeline_mode<synchronous>, transform_indices = @transform_1, window_bounds = array<i64: 128, 1024>}, {pipeline_mode = #tpu.pipeline_mode<synchronous>, transform_indices = @transform_2, window_bounds = array<i64: 1, 1024>}, {pipeline_mode = #tpu.pipeline_mode<synchronous>, transform_indices = @transform_3, window_bounds = array<i64: 1024, 512>}, {pipeline_mode = #tpu.pipeline_mode<synchronous>, transform_indices = @transform_4, window_bounds = array<i64: 1, 512>}, {pipeline_mode = #tpu.pipeline_mode<synchronous>, transform_indices = @transform_5, window_bounds = array<i64: 1, 512>}, {pipeline_mode = #tpu.pipeline_mode<synchronous>, transform_indices = @transform_6, window_bounds = array<i64: 1, 1>}, {transform_indices = @transform_7, window_bounds = array<i64: 1, 80>}]} {
    %c0 = arith.constant 0 : index
    %c0_0 = arith.constant 0 : index
    %0 = vector.load %arg1[%c0, %c0_0] : memref<80x128xf32, #tpu.memory_space<vmem>>, vector<80x128xf32>
    %1 = arith.truncf %0 : vector<80x128xf32> to vector<80x128xbf16>
    %c0_1 = arith.constant 0 : index
    %c0_2 = arith.constant 0 : index
    %2 = vector.load %arg2[%c0_1, %c0_2] : memref<128x1024xbf16, #tpu.memory_space<vmem>>, vector<128x1024xbf16>
    %cst = arith.constant dense<0.000000e+00> : vector<80x1024xf32>
    %3 = tpu.matmul %1, %2, %cst {dimension_numbers = #tpu.dot_dimension_numbers<[1], [0], [0], [1], [0, 0, 1, 1], [], []>} : vector<80x128xbf16>, vector<128x1024xbf16>, vector<80x1024xf32> -> vector<80x1024xf32>
    %c0_3 = arith.constant 0 : index
    %c0_4 = arith.constant 0 : index
    %4 = vector.load %arg3[%c0_3, %c0_4] : memref<1x1024xf32, #tpu.memory_space<vmem>>, vector<1x1024xf32>
    %5 = vector.broadcast %4 : vector<1x1024xf32> to vector<80x1024xf32>
    %6 = arith.addf %3, %5 : vector<80x1024xf32>
    %cst_5 = arith.constant 0.000000e+00 : f32
    %7 = vector.broadcast %cst_5 : f32 to vector<80x1024xf32>
    %8 = arith.maximumf %6, %7 : vector<80x1024xf32>
    %9 = arith.truncf %8 : vector<80x1024xf32> to vector<80x1024xbf16>
    %c0_6 = arith.constant 0 : index
    %c0_7 = arith.constant 0 : index
    %10 = vector.load %arg4[%c0_6, %c0_7] : memref<1024x512xbf16, #tpu.memory_space<vmem>>, vector<1024x512xbf16>
    %cst_8 = arith.constant dense<0.000000e+00> : vector<80x512xf32>
    %11 = tpu.matmul %9, %10, %cst_8 {dimension_numbers = #tpu.dot_dimension_numbers<[1], [0], [0], [1], [0, 0, 1, 1], [], []>} : vector<80x1024xbf16>, vector<1024x512xbf16>, vector<80x512xf32> -> vector<80x512xf32>
    %c0_9 = arith.constant 0 : index
    %c0_10 = arith.constant 0 : index
    %12 = vector.load %arg5[%c0_9, %c0_10] : memref<1x512xf32, #tpu.memory_space<vmem>>, vector<1x512xf32>
    %13 = vector.broadcast %12 : vector<1x512xf32> to vector<80x512xf32>
    %14 = arith.addf %11, %13 : vector<80x512xf32>
    %cst_11 = arith.constant 0.000000e+00 : f32
    %15 = vector.broadcast %cst_11 : f32 to vector<80x512xf32>
    %16 = arith.maximumf %14, %15 : vector<80x512xf32>
    %c0_12 = arith.constant 0 : index
    %c0_13 = arith.constant 0 : index
    %17 = vector.load %arg6[%c0_12, %c0_13] : memref<1x512xf32, #tpu.memory_space<vmem>>, vector<1x512xf32>
    %18 = vector.broadcast %17 : vector<1x512xf32> to vector<80x512xf32>
    %19 = arith.mulf %16, %18 : vector<80x512xf32>
    %cst_14 = arith.constant dense<0.000000e+00> : vector<80xf32>
    %20 = vector.multi_reduction <add>, %19, %cst_14 [1] : vector<80x512xf32> to vector<80xf32>
    %21 = vector.shape_cast %20 : vector<80xf32> to vector<80x1xf32>
    %22 = tpu.transpose %21, [1, 0] : vector<80x1xf32> -> vector<1x80xf32>
    %c0_15 = arith.constant 0 : index
    %c0_16 = arith.constant 0 : index
    %23 = vector.load %arg7[%c0_15, %c0_16] : memref<1x1xf32, #tpu.memory_space<vmem>>, vector<1x1xf32>
    %24 = vector.broadcast %23 : vector<1x1xf32> to vector<1x80xf32>
    %25 = arith.addf %22, %24 : vector<1x80xf32>
    %c0_17 = arith.constant 0 : index
    %c0_18 = arith.constant 0 : index
    %26 = vector.load %arg8[%c0_17, %c0_18] : memref<1x80xf32, #tpu.memory_space<vmem>>, vector<1x80xf32>
    tpu.vector_store %arg8[%c0_17, %c0_18], %25 {strides = array<i32>} : memref<1x80xf32, #tpu.memory_space<vmem>>, vector<1x80xf32>,
    return
  }
  func.func @transform_0(%arg0: i32) -> (i32, i32) {
    %c0_i32 = arith.constant 0 : i32
    %c0_i32_0 = arith.constant 0 : i32
    return %arg0, %c0_i32 : i32, i32
  }
  func.func @transform_1(%arg0: i32) -> (i32, i32) {
    %c0_i32 = arith.constant 0 : i32
    %c0_i32_0 = arith.constant 0 : i32
    %c0_i32_1 = arith.constant 0 : i32
    return %c0_i32, %c0_i32_0 : i32, i32
  }
  func.func @transform_2(%arg0: i32) -> (i32, i32) {
    %c0_i32 = arith.constant 0 : i32
    %c0_i32_0 = arith.constant 0 : i32
    %c0_i32_1 = arith.constant 0 : i32
    return %c0_i32, %c0_i32_0 : i32, i32
  }
  func.func @transform_3(%arg0: i32) -> (i32, i32) {
    %c0_i32 = arith.constant 0 : i32
    %c0_i32_0 = arith.constant 0 : i32
    %c0_i32_1 = arith.constant 0 : i32
    return %c0_i32, %c0_i32_0 : i32, i32
  }
  func.func @transform_4(%arg0: i32) -> (i32, i32) {
    %c0_i32 = arith.constant 0 : i32
    %c0_i32_0 = arith.constant 0 : i32
    %c0_i32_1 = arith.constant 0 : i32
    return %c0_i32, %c0_i32_0 : i32, i32
  }
  func.func @transform_5(%arg0: i32) -> (i32, i32) {
    %c0_i32 = arith.constant 0 : i32
    %c0_i32_0 = arith.constant 0 : i32
    %c0_i32_1 = arith.constant 0 : i32
    return %c0_i32, %c0_i32_0 : i32, i32
  }
  func.func @transform_6(%arg0: i32) -> (i32, i32) {
    %c0_i32 = arith.constant 0 : i32
    %c0_i32_0 = arith.constant 0 : i32
    %c0_i32_1 = arith.constant 0 : i32
    return %c0_i32, %c0_i32_0 : i32, i32
  }
  func.func @transform_7(%arg0: i32) -> (i32, i32) {
    %c0_i32 = arith.constant 0 : i32
    %c0_i32_0 = arith.constant 0 : i32
    return %arg0, %c0_i32 : i32, i32
  }
}

</mosaic_0001>

<llo_original>
// kernel: tpu_custom_call.1
$region0: #{tpu_custom_call.1}
  #allocation0 [shape = 'u32[]', space=smem, size = 0x4, offset = 0x4, fixed_abs, tag = 'smem constant byte address 0x4 - core index']
  #allocation1 [shape = 'u32[144,128]{1,0:T(1,128)}', space=vmem, size = 0x12000, scoped, tag = 'internal scratch']
  #allocation2 [shape = 'f32[1,1]{1,0:T(1,128)S(1)}', space=vmem, size = 0x200, scoped, tag = 'scoped memory for tpu_custom_call.1']
  %s0 = inlined_call_operand.hbm [shape: f32[80,128], index: 0, kind: input, shape index: {}]
  %s1 = inlined_call_operand.hbm [shape: bf16[128,1024], index: 1, kind: input, shape index: {}]
  %s2 = inlined_call_operand.vmem [shape: f32[1,1024], index: 2, kind: input, shape index: {}]
  %s3 = inlined_call_operand.hbm [shape: bf16[1024,512], index: 3, kind: input, shape index: {}]
  %s4 = inlined_call_operand.vmem [shape: f32[1,512], index: 4, kind: input, shape index: {}]
  %s5 = inlined_call_operand.vmem [shape: f32[1,512], index: 5, kind: input, shape index: {}]
  %s6 = inlined_call_operand.<no memory space> [shape: f32[1,1], index: 6, kind: input, shape index: {}]
  %s7 = inlined_call_operand.hbm [shape: f32[1,80], index: 7, kind: output, shape index: {}]
  %s8 = sld [smem:[#allocation0]]
  $region50: #{tpu_custom_call.1} parent=0
    _
  %s10 = ssub.s32 1, %s8
  %s11 = scalar_select 0, %s10, %s8
  %v12 = vstv %s6
  %13 = vst [vmem:[#allocation2] sm:$0x1] %v12
  $region1: #{tpu_custom_call.1} parent=0
    #allocation3 [shape = 'u8[40960]{0}', space=vmem, size = 0xa000, scoped, tag = 'input window, operand 0, single buffered']
    #allocation4 [shape = 's32[1]{0}', space=sflag, size = 0x4, scoped, tag = 'scoped memory for tpu_custom_call.1']
    #allocation5 [shape = 's32[1]{0}', space=sflag, size = 0x4, scoped, tag = 'scoped memory for tpu_custom_call.1']
    #allocation6 [shape = 'u8[262144]{0}', space=vmem, size = 0x40000, scoped, tag = 'input window, operand 1, single buffered']
    #allocation7 [shape = 's32[1]{0}', space=sflag, size = 0x4, scoped, tag = 'scoped memory for tpu_custom_call.1']
    #allocation8 [shape = 'u8[1048576]{0}', space=vmem, size = 0x100000, scoped, tag = 'input window, operand 3, single buffered']
    #allocation9 [shape = 'u8[512]{0}', space=vmem, size = 0x400, scoped, tag = 'output window, operand 0, single buffered']
    %14 = vsyncpa [#allocation4], 0
    %15 = vsyncpa [#allocation7], 0
    %16 = vsyncpa [#allocation5], 0
    // Predicated region
    $region2: #{tpu_custom_call.1} parent=1 // pred_check
      _
    $region3: #{tpu_custom_call.1} parent=1 // pred_check_branch
      %18 = sbr.rel (0) target = $region5
    $region4: #{tpu_custom_call.1} parent=1 // pred_region
      %s20 = ssub.s32 1280, 1280
      %21 = vsyncadd [#allocation4], %s20
      %s22 = sshll.u32 [#allocation3], 4
      %s23 = int_to_ptr.vmem [resolvable:$true] %s22
      %28 = dma.hbm_to_vmem [thread:$0]  %s0, 1280, %s23, [#allocation4], 128, 128, 8
    $region5: #{tpu_custom_call.1} parent=1 // pred_fallthru
      _
    // Predicated region
    $region6: #{tpu_custom_call.1} parent=1 // pred_check
      _
    $region7: #{tpu_custom_call.1} parent=1 // pred_check_branch
      %30 = sbr.rel (0) target = $region9
    $region8: #{tpu_custom_call.1} parent=1 // pred_region
      %s32 = ssub.s32 8192, 8192
      %33 = vsyncadd [#allocation7], %s32
      %s34 = sshll.u32 [#allocation6], 4
      %s35 = int_to_ptr.vmem [resolvable:$true] %s34
      %40 = dma.hbm_to_vmem [thread:$0]  %s1, 8192, %s35, [#allocation7], 512, 512, 32
    $region9: #{tpu_custom_call.1} parent=1 // pred_fallthru
      _
    // Predicated region
    $region10: #{tpu_custom_call.1} parent=1 // pred_check
      _
    $region11: #{tpu_custom_call.1} parent=1 // pred_check_branch
      %42 = sbr.rel (0) target = $region13
    $region12: #{tpu_custom_call.1} parent=1 // pred_region
      _
    $region13: #{tpu_custom_call.1} parent=1 // pred_fallthru
      _
    // Predicated region
    $region14: #{tpu_custom_call.1} parent=1 // pred_check
      _
    $region15: #{tpu_custom_call.1} parent=1 // pred_check_branch
      %44 = sbr.rel (0) target = $region17
    $region16: #{tpu_custom_call.1} parent=1 // pred_region
      %s46 = ssub.s32 32768, 32768
      %47 = vsyncadd [#allocation7], %s46
      %s48 = sshll.u32 [#allocation8], 4
      %s49 = int_to_ptr.vmem [resolvable:$true] %s48
      %54 = dma.hbm_to_vmem [thread:$0]  %s3, 32768, %s49, [#allocation7], 256, 256, 16
    $region17: #{tpu_custom_call.1} parent=1 // pred_fallthru
      _
    // Predicated region
    $region18: #{tpu_custom_call.1} parent=1 // pred_check
      _
    $region19: #{tpu_custom_call.1} parent=1 // pred_check_branch
      %56 = sbr.rel (0) target = $region21
    $region20: #{tpu_custom_call.1} parent=1 // pred_region
      _
    $region21: #{tpu_custom_call.1} parent=1 // pred_fallthru
      _
    // Predicated region
    $region22: #{tpu_custom_call.1} parent=1 // pred_check
      _
    $region23: #{tpu_custom_call.1} parent=1 // pred_check_branch
      %58 = sbr.rel (0) target = $region25
    $region24: #{tpu_custom_call.1} parent=1 // pred_region
      _
    $region25: #{tpu_custom_call.1} parent=1 // pred_fallthru
      _
    // Predicated region
    $region26: #{tpu_custom_call.1} parent=1 // pred_check
      _
    $region27: #{tpu_custom_call.1} parent=1 // pred_check_branch
      %60 = sbr.rel (0) target = $region29
    $region28: #{tpu_custom_call.1} parent=1 // pred_region
      _
    $region29: #{tpu_custom_call.1} parent=1 // pred_fallthru
      _
    // Predicated region
    $region30: #{tpu_custom_call.1} parent=1 // pred_check
      _
    $region31: #{tpu_custom_call.1} parent=1 // pred_check_branch
      %62 = sbr.rel (0) target = $region33
    $region32: #{tpu_custom_call.1} parent=1 // pred_region
      %63 = dma.done [#allocation4], 1280
    $region33: #{tpu_custom_call.1} parent=1 // pred_fallthru
      _
    // Predicated region
    $region34: #{tpu_custom_call.1} parent=1 // pred_check
      _
    $region35: #{tpu_custom_call.1} parent=1 // pred_check_branch
      %65 = sbr.rel (0) target = $region37
    $region36: #{tpu_custom_call.1} parent=1 // pred_region
      %66 = dma.done [#allocation7], 8192
    $region37: #{tpu_custom_call.1} parent=1 // pred_fallthru
      _
    // Predicated region
    $region38: #{tpu_custom_call.1} parent=1 // pred_check
      _
    $region39: #{tpu_custom_call.1} parent=1 // pred_check_branch
      %68 = sbr.rel (0) target = $region41
    $region40: #{tpu_custom_call.1} parent=1 // pred_region
      %69 = dma.done [#allocation7], 32768
    $region41: #{tpu_custom_call.1} parent=1 // pred_fallthru
      _
    %v71 = vld [vmem:[#allocation3] sm:$0xff]
    %v72 = vld [vmem:[#allocation3 + $0x8] sm:$0xff]
    %v73 = vld [vmem:[#allocation3 + $0x10] sm:$0xff]
    %v74 = vld [vmem:[#allocation3 + $0x18] sm:$0xff]
    %v75 = vld [vmem:[#allocation3 + $0x20] sm:$0xff]
    %v76 = vld [vmem:[#allocation3 + $0x28] sm:$0xff]
    %v77 = vld [vmem:[#allocation3 + $0x30] sm:$0xff]
    %v78 = vld [vmem:[#allocation3 + $0x38] sm:$0xff]
    %v79 = vld [vmem:[#allocation3 + $0x40] sm:$0xff]
    %v80 = vld [vmem:[#allocation3 + $0x48] sm:$0xff]
    %v81 = vpack.c.bf16 %v72, %v71
    %v82 = vpack.c.bf16 %v74, %v73
    %v83 = vpack.c.bf16 %v76, %v75
    %v84 = vpack.c.bf16 %v78, %v77
    %v85 = vpack.c.bf16 %v80, %v79
    %v86 = vld [vmem:[#allocation6] sm:$0xff]
    %v87 = vld [vmem:[#allocation6 + $0x8] sm:$0xff]
    %v88 = vld [vmem:[#allocation6 + $0x10] sm:$0xff]
    %v89 = vld [vmem:[#allocation6 + $0x18] sm:$0xff]
    %v90 = vld [vmem:[#allocation6 + $0x20] sm:$0xff]
    %v91 = vld [vmem:[#allocation6 + $0x28] sm:$0xff]
    %v92 = vld [vmem:[#allocation6 + $0x30] sm:$0xff]
    %v93 = vld [vmem:[#allocation6 + $0x38] sm:$0xff]
    %v94 = vld [vmem:[#allocation6 + $0x40] sm:$0xff]
    %v95 = vld [vmem:[#allocation6 + $0x48] sm:$0xff]
    %v96 = vld [vmem:[#allocation6 + $0x50] sm:$0xff]
    %v97 = vld [vmem:[#allocation6 + $0x58] sm:$0xff]
    %v98 = vld [vmem:[#allocation6 + $0x60] sm:$0xff]
    %v99 = vld [vmem:[#allocation6 + $0x68] sm:$0xff]
    %v100 = vld [vmem:[#allocation6 + $0x70] sm:$0xff]
    %v101 = vld [vmem:[#allocation6 + $0x78] sm:$0xff]
    %v102 = vld [vmem:[#allocation6 + $0x80] sm:$0xff]
    %v103 = vld [vmem:[#allocation6 + $0x88] sm:$0xff]
    %v104 = vld [vmem:[#allocation6 + $0x90] sm:$0xff]
    %v105 = vld [vmem:[#allocation6 + $0x98] sm:$0xff]
    %v106 = vld [vmem:[#allocation6 + $0xa0] sm:$0xff]
    %v107 = vld [vmem:[#allocation6 + $0xa8] sm:$0xff]
    %v108 = vld [vmem:[#allocation6 + $0xb0] sm:$0xff]
    %v109 = vld [vmem:[#allocation6 + $0xb8] sm:$0xff]
    %v110 = vld [vmem:[#allocation6 + $0xc0] sm:$0xff]
    %v111 = vld [vmem:[#allocation6 + $0xc8] sm:$0xff]
    %v112 = vld [vmem:[#allocation6 + $0xd0] sm:$0xff]
    %v113 = vld [vmem:[#allocation6 + $0xd8] sm:$0xff]
    %v114 = vld [vmem:[#allocation6 + $0xe0] sm:$0xff]
    %v115 = vld [vmem:[#allocation6 + $0xe8] sm:$0xff]
    %v116 = vld [vmem:[#allocation6 + $0xf0] sm:$0xff]
    %v117 = vld [vmem:[#allocation6 + $0xf8] sm:$0xff]
    %v118 = vld [vmem:[#allocation6 + $0x100] sm:$0xff]
    %v119 = vld [vmem:[#allocation6 + $0x108] sm:$0xff]
    %v120 = vld [vmem:[#allocation6 + $0x110] sm:$0xff]
    %v121 = vld [vmem:[#allocation6 + $0x118] sm:$0xff]
    %v122 = vld [vmem:[#allocation6 + $0x120] sm:$0xff]
    %v123 = vld [vmem:[#allocation6 + $0x128] sm:$0xff]
    %v124 = vld [vmem:[#allocation6 + $0x130] sm:$0xff]
    %v125 = vld [vmem:[#allocation6 + $0x138] sm:$0xff]
    %v126 = vld [vmem:[#allocation6 + $0x140] sm:$0xff]
    %v127 = vld [vmem:[#allocation6 + $0x148] sm:$0xff]
    %v128 = vld [vmem:[#allocation6 + $0x150] sm:$0xff]
    %v129 = vld [vmem:[#allocation6 + $0x158] sm:$0xff]
    %v130 = vld [vmem:[#allocation6 + $0x160] sm:$0xff]
    %v131 = vld [vmem:[#allocation6 + $0x168] sm:$0xff]
    %v132 = vld [vmem:[#allocation6 + $0x170] sm:$0xff]
    %v133 = vld [vmem:[#allocation6 + $0x178] sm:$0xff]
    %v134 = vld [vmem:[#allocation6 + $0x180] sm:$0xff]
    %v135 = vld [vmem:[#allocation6 + $0x188] sm:$0xff]
    %v136 = vld [vmem:[#allocation6 + $0x190] sm:$0xff]
    %v137 = vld [vmem:[#allocation6 + $0x198] sm:$0xff]
    %v138 = vld [vmem:[#allocation6 + $0x1a0] sm:$0xff]
    %v139 = vld [vmem:[#allocation6 + $0x1a8] sm:$0xff]
    %v140 = vld [vmem:[#allocation6 + $0x1b0] sm:$0xff]
    %v141 = vld [vmem:[#allocation6 + $0x1b8] sm:$0xff]
    %v142 = vld [vmem:[#allocation6 + $0x1c0] sm:$0xff]
    %v143 = vld [vmem:[#allocation6 + $0x1c8] sm:$0xff]
    %v144 = vld [vmem:[#allocation6 + $0x1d0] sm:$0xff]
    %v145 = vld [vmem:[#allocation6 + $0x1d8] sm:$0xff]
    %v146 = vld [vmem:[#allocation6 + $0x1e0] sm:$0xff]
    %v147 = vld [vmem:[#allocation6 + $0x1e8] sm:$0xff]
    %v148 = vld [vmem:[#allocation6 + $0x1f0] sm:$0xff]
    %v149 = vld [vmem:[#allocation6 + $0x1f8] sm:$0xff]
    %v150 = vld [vmem:[%s2] sm:$0xff]
    %v152 = vlaneseq
    %v153 = vshrl.u32 %v152, 7
    %v154 = vsub.s32 0, %v153
    %v155 = vrot.slane %v150, %v154
    %v156 = vlaneseq
    %v157 = vshrl.u32 %v156, 7
    %v158 = vsub.s32 1, %v157
    %v159 = vrot.slane %v150, %v158
    %v160 = vlaneseq
    %v161 = vshrl.u32 %v160, 7
    %v162 = vsub.s32 2, %v161
    %v163 = vrot.slane %v150, %v162
    %v164 = vlaneseq
    %v165 = vshrl.u32 %v164, 7
    %v166 = vsub.s32 3, %v165
    %v167 = vrot.slane %v150, %v166
    %v168 = vlaneseq
    %v169 = vshrl.u32 %v168, 7
    %v170 = vsub.s32 4, %v169
    %v171 = vrot.slane %v150, %v170
    %v172 = vlaneseq
    %v173 = vshrl.u32 %v172, 7
    %v174 = vsub.s32 5, %v173
    %v175 = vrot.slane %v150, %v174
    %v176 = vlaneseq
    %v177 = vshrl.u32 %v176, 7
    %v178 = vsub.s32 6, %v177
    %v179 = vrot.slane %v150, %v178
    %v180 = vlaneseq
    %v181 = vshrl.u32 %v180, 7
    %v182 = vsub.s32 7, %v181
    %v183 = vrot.slane %v150, %v182
    %v256 = vunpack.c.l.b16 %v86
    %v257 = vunpack.c.h.b16 %v86
    %v258 = vunpack.c.l.b16 %v87
    %v259 = vunpack.c.h.b16 %v87
    %v260 = vunpack.c.l.b16 %v88
    %v261 = vunpack.c.h.b16 %v88
    %v262 = vunpack.c.l.b16 %v89
    %v263 = vunpack.c.h.b16 %v89
    %v264 = vunpack.c.l.b16 %v90
    %v265 = vunpack.c.h.b16 %v90
    %v266 = vunpack.c.l.b16 %v91
    %v267 = vunpack.c.h.b16 %v91
    %v268 = vunpack.c.l.b16 %v92
    %v269 = vunpack.c.h.b16 %v92
    %v270 = vunpack.c.l.b16 %v93
    %v271 = vunpack.c.h.b16 %v93
    %v272 = vunpack.c.l.b16 %v94
    %v273 = vunpack.c.h.b16 %v94
    %v274 = vunpack.c.l.b16 %v95
    %v275 = vunpack.c.h.b16 %v95
    %v276 = vunpack.c.l.b16 %v96
    %v277 = vunpack.c.h.b16 %v96
    %v278 = vunpack.c.l.b16 %v97
    %v279 = vunpack.c.h.b16 %v97
    %v280 = vunpack.c.l.b16 %v98
    %v281 = vunpack.c.h.b16 %v98
    %v282 = vunpack.c.l.b16 %v99
    %v283 = vunpack.c.h.b16 %v99
    %v284 = vunpack.c.l.b16 %v100
    %v285 = vunpack.c.h.b16 %v100
    %v286 = vunpack.c.l.b16 %v101
    %v287 = vunpack.c.h.b16 %v101
    %v288 = vunpack.c.l.b16 %v102
    %v289 = vunpack.c.h.b16 %v102
    %v290 = vunpack.c.l.b16 %v103
    %v291 = vunpack.c.h.b16 %v103
    %v292 = vunpack.c.l.b16 %v104
    %v293 = vunpack.c.h.b16 %v104
    %v294 = vunpack.c.l.b16 %v105
    %v295 = vunpack.c.h.b16 %v105
    %v296 = vunpack.c.l.b16 %v106
    %v297 = vunpack.c.h.b16 %v106
    %v298 = vunpack.c.l.b16 %v107
    %v299 = vunpack.c.h.b16 %v107
    %v300 = vunpack.c.l.b16 %v108
    %v301 = vunpack.c.h.b16 %v108
    %v302 = vunpack.c.l.b16 %v109
    %v303 = vunpack.c.h.b16 %v109
    %v304 = vunpack.c.l.b16 %v110
    %v305 = vunpack.c.h.b16 %v110
    %v306 = vunpack.c.l.b16 %v111
    %v307 = vunpack.c.h.b16 %v111
    %v308 = vunpack.c.l.b16 %v112
    %v309 = vunpack.c.h.b16 %v112
    %v310 = vunpack.c.l.b16 %v113
    %v311 = vunpack.c.h.b16 %v113
    %v312 = vunpack.c.l.b16 %v114
    %v313 = vunpack.c.h.b16 %v114
    %v314 = vunpack.c.l.b16 %v115
    %v315 = vunpack.c.h.b16 %v115
    %v316 = vunpack.c.l.b16 %v116
    %v317 = vunpack.c.h.b16 %v116
    %v318 = vunpack.c.l.b16 %v117
    %v319 = vunpack.c.h.b16 %v117
    %v320 = vunpack.c.l.b16 %v118
    %v321 = vunpack.c.h.b16 %v118
    %v322 = vunpack.c.l.b16 %v119
    %v323 = vunpack.c.h.b16 %v119
    %v324 = vunpack.c.l.b16 %v120
    %v325 = vunpack.c.h.b16 %v120
    %v326 = vunpack.c.l.b16 %v121
    %v327 = vunpack.c.h.b16 %v121
    %v328 = vunpack.c.l.b16 %v122
    %v329 = vunpack.c.h.b16 %v122
    %v330 = vunpack.c.l.b16 %v123
    %v331 = vunpack.c.h.b16 %v123
    %v332 = vunpack.c.l.b16 %v124
    %v333 = vunpack.c.h.b16 %v124
    %v334 = vunpack.c.l.b16 %v125
    %v335 = vunpack.c.h.b16 %v125
    %v336 = vunpack.c.l.b16 %v126
    %v337 = vunpack.c.h.b16 %v126
    %v338 = vunpack.c.l.b16 %v127
    %v339 = vunpack.c.h.b16 %v127
    %v340 = vunpack.c.l.b16 %v128
    %v341 = vunpack.c.h.b16 %v128
    %v342 = vunpack.c.l.b16 %v129
    %v343 = vunpack.c.h.b16 %v129
    %v344 = vunpack.c.l.b16 %v130
    %v345 = vunpack.c.h.b16 %v130
    %v346 = vunpack.c.l.b16 %v131
    %v347 = vunpack.c.h.b16 %v131
    %v348 = vunpack.c.l.b16 %v132
    %v349 = vunpack.c.h.b16 %v132
    %v350 = vunpack.c.l.b16 %v133
    %v351 = vunpack.c.h.b16 %v133
    %v352 = vunpack.c.l.b16 %v134
    %v353 = vunpack.c.h.b16 %v134
    %v354 = vunpack.c.l.b16 %v135
    %v355 = vunpack.c.h.b16 %v135
    %v356 = vunpack.c.l.b16 %v136
    %v357 = vunpack.c.h.b16 %v136
    %v358 = vunpack.c.l.b16 %v137
    %v359 = vunpack.c.h.b16 %v137
    %v360 = vunpack.c.l.b16 %v138
    %v361 = vunpack.c.h.b16 %v138
    %v362 = vunpack.c.l.b16 %v139
    %v363 = vunpack.c.h.b16 %v139
    %v364 = vunpack.c.l.b16 %v140
    %v365 = vunpack.c.h.b16 %v140
    %v366 = vunpack.c.l.b16 %v141
    %v367 = vunpack.c.h.b16 %v141
    %v368 = vunpack.c.l.b16 %v142
    %v369 = vunpack.c.h.b16 %v142
    %v370 = vunpack.c.l.b16 %v143
    %v371 = vunpack.c.h.b16 %v143
    %v372 = vunpack.c.l.b16 %v144
    %v373 = vunpack.c.h.b16 %v144
    %v374 = vunpack.c.l.b16 %v145
    %v375 = vunpack.c.h.b16 %v145
    %v376 = vunpack.c.l.b16 %v146
    %v377 = vunpack.c.h.b16 %v146
    %v378 = vunpack.c.l.b16 %v147
    %v379 = vunpack.c.h.b16 %v147
    %v380 = vunpack.c.l.b16 %v148
    %v381 = vunpack.c.h.b16 %v148
    %v382 = vunpack.c.l.b16 %v149
    %v383 = vunpack.c.h.b16 %v149
    %v384 = vpack.c.b16 %v264, %v256
    %v385 = vpack.c.b16 %v265, %v257
    %v386 = vpack.c.b16 %v266, %v258
    %v387 = vpack.c.b16 %v267, %v259
    %v388 = vpack.c.b16 %v268, %v260
    %v389 = vpack.c.b16 %v269, %v261
    %v390 = vpack.c.b16 %v270, %v262
    %v391 = vpack.c.b16 %v271, %v263
    %v392 = vpack.c.b16 %v280, %v272
    %v393 = vpack.c.b16 %v281, %v273
    %v394 = vpack.c.b16 %v282, %v274
    %v395 = vpack.c.b16 %v283, %v275
    %v396 = vpack.c.b16 %v284, %v276
    %v397 = vpack.c.b16 %v285, %v277
    %v398 = vpack.c.b16 %v286, %v278
    %v399 = vpack.c.b16 %v287, %v279
    %v400 = vpack.c.b16 %v296, %v288
    %v401 = vpack.c.b16 %v297, %v289
    %v402 = vpack.c.b16 %v298, %v290
    %v403 = vpack.c.b16 %v299, %v291
    %v404 = vpack.c.b16 %v300, %v292
    %v405 = vpack.c.b16 %v301, %v293
    %v406 = vpack.c.b16 %v302, %v294
    %v407 = vpack.c.b16 %v303, %v295
    %v408 = vpack.c.b16 %v312, %v304
    %v409 = vpack.c.b16 %v313, %v305
    %v410 = vpack.c.b16 %v314, %v306
    %v411 = vpack.c.b16 %v315, %v307
    %v412 = vpack.c.b16 %v316, %v308
    %v413 = vpack.c.b16 %v317, %v309
    %v414 = vpack.c.b16 %v318, %v310
    %v415 = vpack.c.b16 %v319, %v311
    %v416 = vpack.c.b16 %v328, %v320
    %v417 = vpack.c.b16 %v329, %v321
    %v418 = vpack.c.b16 %v330, %v322
    %v419 = vpack.c.b16 %v331, %v323
    %v420 = vpack.c.b16 %v332, %v324
    %v421 = vpack.c.b16 %v333, %v325
    %v422 = vpack.c.b16 %v334, %v326
    %v423 = vpack.c.b16 %v335, %v327
    %v424 = vpack.c.b16 %v344, %v336
    %v425 = vpack.c.b16 %v345, %v337
    %v426 = vpack.c.b16 %v346, %v338
    %v427 = vpack.c.b16 %v347, %v339
    %v428 = vpack.c.b16 %v348, %v340
    %v429 = vpack.c.b16 %v349, %v341
    %v430 = vpack.c.b16 %v350, %v342
    %v431 = vpack.c.b16 %v351, %v343
    %v432 = vpack.c.b16 %v360, %v352
    %v433 = vpack.c.b16 %v361, %v353
    %v434 = vpack.c.b16 %v362, %v354
    %v435 = vpack.c.b16 %v363, %v355
    %v436 = vpack.c.b16 %v364, %v356
    %v437 = vpack.c.b16 %v365, %v357
    %v438 = vpack.c.b16 %v366, %v358
    %v439 = vpack.c.b16 %v367, %v359
    %v440 = vpack.c.b16 %v376, %v368
    %v441 = vpack.c.b16 %v377, %v369
    %v442 = vpack.c.b16 %v378, %v370
    %v443 = vpack.c.b16 %v379, %v371
    %v444 = vpack.c.b16 %v380, %v372
    %v445 = vpack.c.b16 %v381, %v373
    %v446 = vpack.c.b16 %v382, %v374
    %v447 = vpack.c.b16 %v383, %v375
    %512 = vmatprep.subr.bf16.mxu0 %v385
    %513 = vmatpush1.bf16.msra.mxu0 %v384
    %514 = vmatprep.subr.bf16.mxu0 %v393
    %515 = vmatpush1.bf16.msra.mxu0 %v392
    %516 = vmatprep.subr.bf16.mxu0 %v401
    %517 = vmatpush1.bf16.msra.mxu0 %v400
    %518 = vmatprep.subr.bf16.mxu0 %v409
    %519 = vmatpush1.bf16.msra.mxu0 %v408
    %520 = vmatprep.subr.bf16.mxu0 %v417
    %521 = vmatpush1.bf16.msra.mxu0 %v416
    %522 = vmatprep.subr.bf16.mxu0 %v425
    %523 = vmatpush1.bf16.msra.mxu0 %v424
    %524 = vmatprep.subr.bf16.mxu0 %v433
    %525 = vmatpush1.bf16.msra.mxu0 %v432
    %526 = vmatprep.subr.bf16.mxu0 %v441
    %527 = vmatpush1.bf16.msra.mxu0 %v440
    %528 = vmatprep.subr.bf16.mxu0 0
    %529 = vmatpush1.bf16.msra.mxu0 0
    %530 = vmatprep.subr.bf16.mxu0 0
    %531 = vmatpush1.bf16.msra.mxu0 0
    %532 = vmatprep.subr.bf16.mxu0 0
    %533 = vmatpush1.bf16.msra.mxu0 0
    %534 = vmatprep.subr.bf16.mxu0 0
    %535 = vmatpush1.bf16.msra.mxu0 0
    %536 = vmatprep.subr.bf16.mxu0 0
    %537 = vmatpush1.bf16.msra.mxu0 0
    %538 = vmatprep.subr.bf16.mxu0 0
    %539 = vmatpush1.bf16.msra.mxu0 0
    %540 = vmatprep.subr.bf16.mxu0 0
    %541 = vmatpush1.bf16.msra.mxu0 0
    %542 = vmatprep.subr.bf16.mxu0 0
    %543 = vmatpush1.bf16.msra.mxu0 0
    %544 = vmatprep.mubr.bf16.mxu0 0
    %545 = vmatmul.mubr.bf16.gmra.mrb[0].mxu0 %v81
    %v546 = vpop.f32.mrb[0].mxu0
    %v547 = vadd.f32 %v155, %v546
    %v548 = vpop.f32.mrb[0].mxu0
    %v549 = vadd.f32 %v159, %v548
    %v550 = vpop.f32.mrb[0].mxu0
    %v551 = vadd.f32 %v155, %v550
    %v552 = vpop.f32.mrb[0].mxu0
    %v553 = vadd.f32 %v159, %v552
    %554 = vmatprep.mubr.bf16.mxu0 0
    %555 = vmatmul.mubr.bf16.gmra.mrb[0].mxu0 %v82
    %v556 = vpop.f32.mrb[0].mxu0
    %v557 = vadd.f32 %v155, %v556
    %v558 = vpop.f32.mrb[0].mxu0
    %v559 = vadd.f32 %v159, %v558
    %v560 = vpop.f32.mrb[0].mxu0
    %v561 = vadd.f32 %v155, %v560
    %v562 = vpop.f32.mrb[0].mxu0
    %v563 = vadd.f32 %v159, %v562
    %564 = vmatprep.mubr.bf16.mxu0 0
    %565 = vmatmul.mubr.bf16.gmra.mrb[0].mxu0 %v83
    %v566 = vpop.f32.mrb[0].mxu0
    %v567 = vadd.f32 %v155, %v566
    %v568 = vpop.f32.mrb[0].mxu0
    %v569 = vadd.f32 %v159, %v568
    %v570 = vpop.f32.mrb[0].mxu0
    %v571 = vadd.f32 %v155, %v570
    %v572 = vpop.f32.mrb[0].mxu0
    %v573 = vadd.f32 %v159, %v572
    %574 = vmatprep.mubr.bf16.mxu0 0
    %575 = vmatmul.mubr.bf16.gmra.mrb[0].mxu0 %v84
    %v576 = vpop.f32.mrb[0].mxu0
    %v577 = vadd.f32 %v155, %v576
    %v578 = vpop.f32.mrb[0].mxu0
    %v579 = vadd.f32 %v159, %v578
    %v580 = vpop.f32.mrb[0].mxu0
    %v581 = vadd.f32 %v155, %v580
    %v582 = vpop.f32.mrb[0].mxu0
    %v583 = vadd.f32 %v159, %v582
    %584 = vmatprep.mubr.bf16.mxu0 0
    %585 = vmatmul.mubr.bf16.gmra.mrb[0].mxu0 %v85
    %v586 = vpop.f32.mrb[0].mxu0
    %v587 = vadd.f32 %v155, %v586
    %v588 = vpop.f32.mrb[0].mxu0
    %v589 = vadd.f32 %v159, %v588
    %v590 = vpop.f32.mrb[0].mxu0
    %v591 = vadd.f32 %v155, %v590
    %v592 = vpop.f32.mrb[0].mxu0
    %v593 = vadd.f32 %v159, %v592
    %594 = vdwg.mxu0
    %595 = vmatprep.subr.bf16.mxu0 %v387
    %596 = vmatpush1.bf16.msra.mxu0 %v386
    %597 = vmatprep.subr.bf16.mxu0 %v395
    %598 = vmatpush1.bf16.msra.mxu0 %v394
    %599 = vmatprep.subr.bf16.mxu0 %v403
    %600 = vmatpush1.bf16.msra.mxu0 %v402
    %601 = vmatprep.subr.bf16.mxu0 %v411
    %602 = vmatpush1.bf16.msra.mxu0 %v410
    %603 = vmatprep.subr.bf16.mxu0 %v419
    %604 = vmatpush1.bf16.msra.mxu0 %v418
    %605 = vmatprep.subr.bf16.mxu0 %v427
    %606 = vmatpush1.bf16.msra.mxu0 %v426
    %607 = vmatprep.subr.bf16.mxu0 %v435
    %608 = vmatpush1.bf16.msra.mxu0 %v434
    %609 = vmatprep.subr.bf16.mxu0 %v443
    %610 = vmatpush1.bf16.msra.mxu0 %v442
    %611 = vmatprep.subr.bf16.mxu0 0
    %612 = vmatpush1.bf16.msra.mxu0 0
    %613 = vmatprep.subr.bf16.mxu0 0
    %614 = vmatpush1.bf16.msra.mxu0 0
    %615 = vmatprep.subr.bf16.mxu0 0
    %616 = vmatpush1.bf16.msra.mxu0 0
    %617 = vmatprep.subr.bf16.mxu0 0
    %618 = vmatpush1.bf16.msra.mxu0 0
    %619 = vmatprep.subr.bf16.mxu0 0
    %620 = vmatpush1.bf16.msra.mxu0 0
    %621 = vmatprep.subr.bf16.mxu0 0
    %622 = vmatpush1.bf16.msra.mxu0 0
    %623 = vmatprep.subr.bf16.mxu0 0
    %624 = vmatpush1.bf16.msra.mxu0 0
    %625 = vmatprep.subr.bf16.mxu0 0
    %626 = vmatpush1.bf16.msra.mxu0 0
    %627 = vmatprep.mubr.bf16.mxu0 0
    %628 = vmatmul.mubr.bf16.gmra.mrb[0].mxu0 %v81
    %v629 = vpop.f32.mrb[0].mxu0
    %v630 = vadd.f32 %v163, %v629
    %v631 = vpop.f32.mrb[0].mxu0
    %v632 = vadd.f32 %v167, %v631
    %v633 = vpop.f32.mrb[0].mxu0
    %v634 = vadd.f32 %v163, %v633
    %v635 = vpop.f32.mrb[0].mxu0
    %v636 = vadd.f32 %v167, %v635
    %637 = vmatprep.mubr.bf16.mxu0 0
    %638 = vmatmul.mubr.bf16.gmra.mrb[0].mxu0 %v82
    %v639 = vpop.f32.mrb[0].mxu0
    %v640 = vadd.f32 %v163, %v639
    %v641 = vpop.f32.mrb[0].mxu0
    %v642 = vadd.f32 %v167, %v641
    %v643 = vpop.f32.mrb[0].mxu0
    %v644 = vadd.f32 %v163, %v643
    %v645 = vpop.f32.mrb[0].mxu0
    %v646 = vadd.f32 %v167, %v645
    %647 = vmatprep.mubr.bf16.mxu0 0
    %648 = vmatmul.mubr.bf16.gmra.mrb[0].mxu0 %v83
    %v649 = vpop.f32.mrb[0].mxu0
    %v650 = vadd.f32 %v163, %v649
    %v651 = vpop.f32.mrb[0].mxu0
    %v652 = vadd.f32 %v167, %v651
    %v653 = vpop.f32.mrb[0].mxu0
    %v654 = vadd.f32 %v163, %v653
    %v655 = vpop.f32.mrb[0].mxu0
    %v656 = vadd.f32 %v167, %v655
    %657 = vmatprep.mubr.bf16.mxu0 0
    %658 = vmatmul.mubr.bf16.gmra.mrb[0].mxu0 %v84
    %v659 = vpop.f32.mrb[0].mxu0
    %v660 = vadd.f32 %v163, %v659
    %v661 = vpop.f32.mrb[0].mxu0
    %v662 = vadd.f32 %v167, %v661
    %v663 = vpop.f32.mrb[0].mxu0
    %v664 = vadd.f32 %v163, %v663
    %v665 = vpop.f32.mrb[0].mxu0
    %v666 = vadd.f32 %v167, %v665
    %667 = vmatprep.mubr.bf16.mxu0 0
    %668 = vmatmul.mubr.bf16.gmra.mrb[0].mxu0 %v85
    %v669 = vpop.f32.mrb[0].mxu0
    %v670 = vadd.f32 %v163, %v669
    %v671 = vpop.f32.mrb[0].mxu0
    %v672 = vadd.f32 %v167, %v671
    %v673 = vpop.f32.mrb[0].mxu0
    %v674 = vadd.f32 %v163, %v673
    %v675 = vpop.f32.mrb[0].mxu0
    %v676 = vadd.f32 %v167, %v675
    %677 = vdwg.mxu0
    %678 = vmatprep.subr.bf16.mxu0 %v389
    %679 = vmatpush1.bf16.msra.mxu0 %v388
    %680 = vmatprep.subr.bf16.mxu0 %v397
    %681 = vmatpush1.bf16.msra.mxu0 %v396
    %682 = vmatprep.subr.bf16.mxu0 %v405
    %683 = vmatpush1.bf16.msra.mxu0 %v404
    %684 = vmatprep.subr.bf16.mxu0 %v413
    %685 = vmatpush1.bf16.msra.mxu0 %v412
    %686 = vmatprep.subr.bf16.mxu0 %v421
    %687 = vmatpush1.bf16.msra.mxu0 %v420
    %688 = vmatprep.subr.bf16.mxu0 %v429
    %689 = vmatpush1.bf16.msra.mxu0 %v428
    %690 = vmatprep.subr.bf16.mxu0 %v437
    %691 = vmatpush1.bf16.msra.mxu0 %v436
    %692 = vmatprep.subr.bf16.mxu0 %v445
    %693 = vmatpush1.bf16.msra.mxu0 %v444
    %694 = vmatprep.subr.bf16.mxu0 0
    %695 = vmatpush1.bf16.msra.mxu0 0
    %696 = vmatprep.subr.bf16.mxu0 0
    %697 = vmatpush1.bf16.msra.mxu0 0
    %698 = vmatprep.subr.bf16.mxu0 0
    %699 = vmatpush1.bf16.msra.mxu0 0
    %700 = vmatprep.subr.bf16.mxu0 0
    %701 = vmatpush1.bf16.msra.mxu0 0
    %702 = vmatprep.subr.bf16.mxu0 0
    %703 = vmatpush1.bf16.msra.mxu0 0
    %704 = vmatprep.subr.bf16.mxu0 0
    %705 = vmatpush1.bf16.msra.mxu0 0
    %706 = vmatprep.subr.bf16.mxu0 0
    %707 = vmatpush1.bf16.msra.mxu0 0
    %708 = vmatprep.subr.bf16.mxu0 0
    %709 = vmatpush1.bf16.msra.mxu0 0
    %710 = vmatprep.mubr.bf16.mxu0 0
    %711 = vmatmul.mubr.bf16.gmra.mrb[0].mxu0 %v81
    %v712 = vpop.f32.mrb[0].mxu0
    %v713 = vadd.f32 %v171, %v712
    %v714 = vpop.f32.mrb[0].mxu0
    %v715 = vadd.f32 %v175, %v714
    %v716 = vpop.f32.mrb[0].mxu0
    %v717 = vadd.f32 %v171, %v716
    %v718 = vpop.f32.mrb[0].mxu0
    %v719 = vadd.f32 %v175, %v718
    %720 = vmatprep.mubr.bf16.mxu0 0
    %721 = vmatmul.mubr.bf16.gmra.mrb[0].mxu0 %v82
    %v722 = vpop.f32.mrb[0].mxu0
    %v723 = vadd.f32 %v171, %v722
    %v724 = vpop.f32.mrb[0].mxu0
    %v725 = vadd.f32 %v175, %v724
    %v726 = vpop.f32.mrb[0].mxu0
    %v727 = vadd.f32 %v171, %v726
    %v728 = vpop.f32.mrb[0].mxu0
    %v729 = vadd.f32 %v175, %v728
    %730 = vmatprep.mubr.bf16.mxu0 0
    %731 = vmatmul.mubr.bf16.gmra.mrb[0].mxu0 %v83
    %v732 = vpop.f32.mrb[0].mxu0
    %v733 = vadd.f32 %v171, %v732
    %v734 = vpop.f32.mrb[0].mxu0
    %v735 = vadd.f32 %v175, %v734
    %v736 = vpop.f32.mrb[0].mxu0
    %v737 = vadd.f32 %v171, %v736
    %v738 = vpop.f32.mrb[0].mxu0
    %v739 = vadd.f32 %v175, %v738
    %740 = vmatprep.mubr.bf16.mxu0 0
    %741 = vmatmul.mubr.bf16.gmra.mrb[0].mxu0 %v84
    %v742 = vpop.f32.mrb[0].mxu0
    %v743 = vadd.f32 %v171, %v742
    %v744 = vpop.f32.mrb[0].mxu0
    %v745 = vadd.f32 %v175, %v744
    %v746 = vpop.f32.mrb[0].mxu0
    %v747 = vadd.f32 %v171, %v746
    %v748 = vpop.f32.mrb[0].mxu0
    %v749 = vadd.f32 %v175, %v748
    %750 = vmatprep.mubr.bf16.mxu0 0
    %751 = vmatmul.mubr.bf16.gmra.mrb[0].mxu0 %v85
    %v752 = vpop.f32.mrb[0].mxu0
    %v753 = vadd.f32 %v171, %v752
    %v754 = vpop.f32.mrb[0].mxu0
    %v755 = vadd.f32 %v175, %v754
    %v756 = vpop.f32.mrb[0].mxu0
    %v757 = vadd.f32 %v171, %v756
    %v758 = vpop.f32.mrb[0].mxu0
    %v759 = vadd.f32 %v175, %v758
    %760 = vdwg.mxu0
    %761 = vmatprep.subr.bf16.mxu0 %v391
    %762 = vmatpush1.bf16.msra.mxu0 %v390
    %763 = vmatprep.subr.bf16.mxu0 %v399
    %764 = vmatpush1.bf16.msra.mxu0 %v398
    %765 = vmatprep.subr.bf16.mxu0 %v407
    %766 = vmatpush1.bf16.msra.mxu0 %v406
    %767 = vmatprep.subr.bf16.mxu0 %v415
    %768 = vmatpush1.bf16.msra.mxu0 %v414
    %769 = vmatprep.subr.bf16.mxu0 %v423
    %770 = vmatpush1.bf16.msra.mxu0 %v422
    %771 = vmatprep.subr.bf16.mxu0 %v431
    %772 = vmatpush1.bf16.msra.mxu0 %v430
    %773 = vmatprep.subr.bf16.mxu0 %v439
    %774 = vmatpush1.bf16.msra.mxu0 %v438
    %775 = vmatprep.subr.bf16.mxu0 %v447
    %776 = vmatpush1.bf16.msra.mxu0 %v446
    %777 = vmatprep.subr.bf16.mxu0 0
    %778 = vmatpush1.bf16.msra.mxu0 0
    %779 = vmatprep.subr.bf16.mxu0 0
    %780 = vmatpush1.bf16.msra.mxu0 0
    %781 = vmatprep.subr.bf16.mxu0 0
    %782 = vmatpush1.bf16.msra.mxu0 0
    %783 = vmatprep.subr.bf16.mxu0 0
    %784 = vmatpush1.bf16.msra.mxu0 0
    %785 = vmatprep.subr.bf16.mxu0 0
    %786 = vmatpush1.bf16.msra.mxu0 0
    %787 = vmatprep.subr.bf16.mxu0 0
    %788 = vmatpush1.bf16.msra.mxu0 0
    %789 = vmatprep.subr.bf16.mxu0 0
    %790 = vmatpush1.bf16.msra.mxu0 0
    %791 = vmatprep.subr.bf16.mxu0 0
    %792 = vmatpush1.bf16.msra.mxu0 0
    %793 = vmatprep.mubr.bf16.mxu0 0
    %794 = vmatmul.mubr.bf16.gmra.mrb[0].mxu0 %v81
    %v795 = vpop.f32.mrb[0].mxu0
    %v796 = vadd.f32 %v179, %v795
    %v797 = vpop.f32.mrb[0].mxu0
    %v798 = vadd.f32 %v183, %v797
    %v799 = vpop.f32.mrb[0].mxu0
    %v800 = vadd.f32 %v179, %v799
    %v801 = vpop.f32.mrb[0].mxu0
    %v802 = vadd.f32 %v183, %v801
    %803 = vmatprep.mubr.bf16.mxu0 0
    %804 = vmatmul.mubr.bf16.gmra.mrb[0].mxu0 %v82
    %v805 = vpop.f32.mrb[0].mxu0
    %v806 = vadd.f32 %v179, %v805
    %v807 = vpop.f32.mrb[0].mxu0
    %v808 = vadd.f32 %v183, %v807
    %v809 = vpop.f32.mrb[0].mxu0
    %v810 = vadd.f32 %v179, %v809
    %v811 = vpop.f32.mrb[0].mxu0
    %v812 = vadd.f32 %v183, %v811
    %813 = vmatprep.mubr.bf16.mxu0 0
    %814 = vmatmul.mubr.bf16.gmra.mrb[0].mxu0 %v83
    %v815 = vpop.f32.mrb[0].mxu0
    %v816 = vadd.f32 %v179, %v815
    %v817 = vpop.f32.mrb[0].mxu0
    %v818 = vadd.f32 %v183, %v817
    %v819 = vpop.f32.mrb[0].mxu0
    %v820 = vadd.f32 %v179, %v819
    %v821 = vpop.f32.mrb[0].mxu0
    %v822 = vadd.f32 %v183, %v821
    %823 = vmatprep.mubr.bf16.mxu0 0
    %824 = vmatmul.mubr.bf16.gmra.mrb[0].mxu0 %v84
    %v825 = vpop.f32.mrb[0].mxu0
    %v826 = vadd.f32 %v179, %v825
    %v827 = vpop.f32.mrb[0].mxu0
    %v828 = vadd.f32 %v183, %v827
    %v829 = vpop.f32.mrb[0].mxu0
    %v830 = vadd.f32 %v179, %v829
    %v831 = vpop.f32.mrb[0].mxu0
    %v832 = vadd.f32 %v183, %v831
    %833 = vmatprep.mubr.bf16.mxu0 0
    %834 = vmatmul.mubr.bf16.gmra.mrb[0].mxu0 %v85
    %v835 = vpop.f32.mrb[0].mxu0
    %v836 = vadd.f32 %v179, %v835
    %v837 = vpop.f32.mrb[0].mxu0
    %v838 = vadd.f32 %v183, %v837
    %v839 = vpop.f32.mrb[0].mxu0
    %v840 = vadd.f32 %v179, %v839
    %v841 = vpop.f32.mrb[0].mxu0
    %v842 = vadd.f32 %v183, %v841
    %843 = vdwg.mxu0
    %v844 = vmax.f32 %v547, 0.0
    %v845 = vmax.f32 %v549, 0.0
    %v846 = vmax.f32 %v630, 0.0
    %v847 = vmax.f32 %v632, 0.0
    %v848 = vmax.f32 %v713, 0.0
    %v849 = vmax.f32 %v715, 0.0
    %v850 = vmax.f32 %v796, 0.0
    %v851 = vmax.f32 %v798, 0.0
    %v852 = vmax.f32 %v551, 0.0
    %v853 = vmax.f32 %v553, 0.0
    %v854 = vmax.f32 %v634, 0.0
    %v855 = vmax.f32 %v636, 0.0
    %v856 = vmax.f32 %v717, 0.0
    %v857 = vmax.f32 %v719, 0.0
    %v858 = vmax.f32 %v800, 0.0
    %v859 = vmax.f32 %v802, 0.0
    %v860 = vmax.f32 %v557, 0.0
    %v861 = vmax.f32 %v559, 0.0
    %v862 = vmax.f32 %v640, 0.0
    %v863 = vmax.f32 %v642, 0.0
    %v864 = vmax.f32 %v723, 0.0
    %v865 = vmax.f32 %v725, 0.0
    %v866 = vmax.f32 %v806, 0.0
    %v867 = vmax.f32 %v808, 0.0
    %v868 = vmax.f32 %v561, 0.0
    %v869 = vmax.f32 %v563, 0.0
    %v870 = vmax.f32 %v644, 0.0
    %v871 = vmax.f32 %v646, 0.0
    %v872 = vmax.f32 %v727, 0.0
    %v873 = vmax.f32 %v729, 0.0
    %v874 = vmax.f32 %v810, 0.0
    %v875 = vmax.f32 %v812, 0.0
    %v876 = vmax.f32 %v567, 0.0
    %v877 = vmax.f32 %v569, 0.0
    %v878 = vmax.f32 %v650, 0.0
    %v879 = vmax.f32 %v652, 0.0
    %v880 = vmax.f32 %v733, 0.0
    %v881 = vmax.f32 %v735, 0.0
    %v882 = vmax.f32 %v816, 0.0
    %v883 = vmax.f32 %v818, 0.0
    %v884 = vmax.f32 %v571, 0.0
    %v885 = vmax.f32 %v573, 0.0
    %v886 = vmax.f32 %v654, 0.0
    %v887 = vmax.f32 %v656, 0.0
    %v888 = vmax.f32 %v737, 0.0
    %v889 = vmax.f32 %v739, 0.0
    %v890 = vmax.f32 %v820, 0.0
    %v891 = vmax.f32 %v822, 0.0
    %v892 = vmax.f32 %v577, 0.0
    %v893 = vmax.f32 %v579, 0.0
    %v894 = vmax.f32 %v660, 0.0
    %v895 = vmax.f32 %v662, 0.0
    %v896 = vmax.f32 %v743, 0.0
    %v897 = vmax.f32 %v745, 0.0
    %v898 = vmax.f32 %v826, 0.0
    %v899 = vmax.f32 %v828, 0.0
    %v900 = vmax.f32 %v581, 0.0
    %v901 = vmax.f32 %v583, 0.0
    %v902 = vmax.f32 %v664, 0.0
    %v903 = vmax.f32 %v666, 0.0
    %v904 = vmax.f32 %v747, 0.0
    %v905 = vmax.f32 %v749, 0.0
    %v906 = vmax.f32 %v830, 0.0
    %v907 = vmax.f32 %v832, 0.0
    %v908 = vmax.f32 %v587, 0.0
    %v909 = vmax.f32 %v589, 0.0
    %v910 = vmax.f32 %v670, 0.0
    %v911 = vmax.f32 %v672, 0.0
    %v912 = vmax.f32 %v753, 0.0
    %v913 = vmax.f32 %v755, 0.0
    %v914 = vmax.f32 %v836, 0.0
    %v915 = vmax.f32 %v838, 0.0
    %v916 = vmax.f32 %v591, 0.0
    %v917 = vmax.f32 %v593, 0.0
    %v918 = vmax.f32 %v674, 0.0
    %v919 = vmax.f32 %v676, 0.0
    %v920 = vmax.f32 %v757, 0.0
    %v921 = vmax.f32 %v759, 0.0
    %v922 = vmax.f32 %v840, 0.0
    %v923 = vmax.f32 %v842, 0.0
    %v924 = vpack.c.bf16 %v852, %v844
    %v925 = vpack.c.bf16 %v853, %v845
    %v926 = vpack.c.bf16 %v854, %v846
    %v927 = vpack.c.bf16 %v855, %v847
    %v928 = vpack.c.bf16 %v856, %v848
    %v929 = vpack.c.bf16 %v857, %v849
    %v930 = vpack.c.bf16 %v858, %v850
    %v931 = vpack.c.bf16 %v859, %v851
    %v932 = vpack.c.bf16 %v868, %v860
    %v933 = vpack.c.bf16 %v869, %v861
    %v934 = vpack.c.bf16 %v870, %v862
    %v935 = vpack.c.bf16 %v871, %v863
    %v936 = vpack.c.bf16 %v872, %v864
    %v937 = vpack.c.bf16 %v873, %v865
    %v938 = vpack.c.bf16 %v874, %v866
    %v939 = vpack.c.bf16 %v875, %v867
    %v940 = vpack.c.bf16 %v884, %v876
    %v941 = vpack.c.bf16 %v885, %v877
    %v942 = vpack.c.bf16 %v886, %v878
    %v943 = vpack.c.bf16 %v887, %v879
    %v944 = vpack.c.bf16 %v888, %v880
    %v945 = vpack.c.bf16 %v889, %v881
    %v946 = vpack.c.bf16 %v890, %v882
    %v947 = vpack.c.bf16 %v891, %v883
    %v948 = vpack.c.bf16 %v900, %v892
    %v949 = vpack.c.bf16 %v901, %v893
    %v950 = vpack.c.bf16 %v902, %v894
    %v951 = vpack.c.bf16 %v903, %v895
    %v952 = vpack.c.bf16 %v904, %v896
    %v953 = vpack.c.bf16 %v905, %v897
    %v954 = vpack.c.bf16 %v906, %v898
    %v955 = vpack.c.bf16 %v907, %v899
    %v956 = vpack.c.bf16 %v916, %v908
    %v957 = vpack.c.bf16 %v917, %v909
    %v958 = vpack.c.bf16 %v918, %v910
    %v959 = vpack.c.bf16 %v919, %v911
    %v960 = vpack.c.bf16 %v920, %v912
    %v961 = vpack.c.bf16 %v921, %v913
    %v962 = vpack.c.bf16 %v922, %v914
    %v963 = vpack.c.bf16 %v923, %v915
    %v964 = vld [vmem:[#allocation8] sm:$0xff]
    %v965 = vld [vmem:[#allocation8 + $0x8] sm:$0xff]
    %v966 = vld [vmem:[#allocation8 + $0x10] sm:$0xff]
    %v967 = vld [vmem:[#allocation8 + $0x18] sm:$0xff]
    %v968 = vld [vmem:[#allocation8 + $0x20] sm:$0xff]
    %v969 = vld [vmem:[#allocation8 + $0x28] sm:$0xff]
    %v970 = vld [vmem:[#allocation8 + $0x30] sm:$0xff]
    %v971 = vld [vmem:[#allocation8 + $0x38] sm:$0xff]
    %v972 = vld [vmem:[#allocation8 + $0x40] sm:$0xff]
    %v973 = vld [vmem:[#allocation8 + $0x48] sm:$0xff]
    %v974 = vld [vmem:[#allocation8 + $0x50] sm:$0xff]
    %v975 = vld [vmem:[#allocation8 + $0x58] sm:$0xff]
    %v976 = vld [vmem:[#allocation8 + $0x60] sm:$0xff]
    %v977 = vld [vmem:[#allocation8 + $0x68] sm:$0xff]
    %v978 = vld [vmem:[#allocation8 + $0x70] sm:$0xff]
    %v979 = vld [vmem:[#allocation8 + $0x78] sm:$0xff]
    %v980 = vld [vmem:[#allocation8 + $0x80] sm:$0xff]
    %v981 = vld [vmem:[#allocation8 + $0x88] sm:$0xff]
    %v982 = vld [vmem:[#allocation8 + $0x90] sm:$0xff]
    %v983 = vld [vmem:[#allocation8 + $0x98] sm:$0xff]
    %v984 = vld [vmem:[#allocation8 + $0xa0] sm:$0xff]
    %v985 = vld [vmem:[#allocation8 + $0xa8] sm:$0xff]
    %v986 = vld [vmem:[#allocation8 + $0xb0] sm:$0xff]
    %v987 = vld [vmem:[#allocation8 + $0xb8] sm:$0xff]
    %v988 = vld [vmem:[#allocation8 + $0xc0] sm:$0xff]
    %v989 = vld [vmem:[#allocation8 + $0xc8] sm:$0xff]
    %v990 = vld [vmem:[#allocation8 + $0xd0] sm:$0xff]
    %v991 = vld [vmem:[#allocation8 + $0xd8] sm:$0xff]
    %v992 = vld [vmem:[#allocation8 + $0xe0] sm:$0xff]
    %v993 = vld [vmem:[#allocation8 + $0xe8] sm:$0xff]
    %v994 = vld [vmem:[#allocation8 + $0xf0] sm:$0xff]
    %v995 = vld [vmem:[#allocation8 + $0xf8] sm:$0xff]
    %v996 = vld [vmem:[#allocation8 + $0x100] sm:$0xff]
    %v997 = vld [vmem:[#allocation8 + $0x108] sm:$0xff]
    %v998 = vld [vmem:[#allocation8 + $0x110] sm:$0xff]
    %v999 = vld [vmem:[#allocation8 + $0x118] sm:$0xff]
    %v1000 = vld [vmem:[#allocation8 + $0x120] sm:$0xff]
    %v1001 = vld [vmem:[#allocation8 + $0x128] sm:$0xff]
    %v1002 = vld [vmem:[#allocation8 + $0x130] sm:$0xff]
    %v1003 = vld [vmem:[#allocation8 + $0x138] sm:$0xff]
    %v1004 = vld [vmem:[#allocation8 + $0x140] sm:$0xff]
    %v1005 = vld [vmem:[#allocation8 + $0x148] sm:$0xff]
    %v1006 = vld [vmem:[#allocation8 + $0x150] sm:$0xff]
    %v1007 = vld [vmem:[#allocation8 + $0x158] sm:$0xff]
    %v1008 = vld [vmem:[#allocation8 + $0x160] sm:$0xff]
    %v1009 = vld [vmem:[#allocation8 + $0x168] sm:$0xff]
    %v1010 = vld [vmem:[#allocation8 + $0x170] sm:$0xff]
    %v1011 = vld [vmem:[#allocation8 + $0x178] sm:$0xff]
    %v1012 = vld [vmem:[#allocation8 + $0x180] sm:$0xff]
    %v1013 = vld [vmem:[#allocation8 + $0x188] sm:$0xff]
    %v1014 = vld [vmem:[#allocation8 + $0x190] sm:$0xff]
    %v1015 = vld [vmem:[#allocation8 + $0x198] sm:$0xff]
    %v1016 = vld [vmem:[#allocation8 + $0x1a0] sm:$0xff]
    %v1017 = vld [vmem:[#allocation8 + $0x1a8] sm:$0xff]
    %v1018 = vld [vmem:[#allocation8 + $0x1b0] sm:$0xff]
    %v1019 = vld [vmem:[#allocation8 + $0x1b8] sm:$0xff]
    %v1020 = vld [vmem:[#allocation8 + $0x1c0] sm:$0xff]
    %v1021 = vld [vmem:[#allocation8 + $0x1c8] sm:$0xff]
    %v1022 = vld [vmem:[#allocation8 + $0x1d0] sm:$0xff]
    %v1023 = vld [vmem:[#allocation8 + $0x1d8] sm:$0xff]
    %v1024 = vld [vmem:[#allocation8 + $0x1e0] sm:$0xff]
    %v1025 = vld [vmem:[#allocation8 + $0x1e8] sm:$0xff]
    %v1026 = vld [vmem:[#allocation8 + $0x1f0] sm:$0xff]
    %v1027 = vld [vmem:[#allocation8 + $0x1f8] sm:$0xff]
    %v1028 = vld [vmem:[#allocation8 + $0x200] sm:$0xff]
    %v1029 = vld [vmem:[#allocation8 + $0x208] sm:$0xff]
    %v1030 = vld [vmem:[#allocation8 + $0x210] sm:$0xff]
    %v1031 = vld [vmem:[#allocation8 + $0x218] sm:$0xff]
    %v1032 = vld [vmem:[#allocation8 + $0x220] sm:$0xff]
    %v1033 = vld [vmem:[#allocation8 + $0x228] sm:$0xff]
    %v1034 = vld [vmem:[#allocation8 + $0x230] sm:$0xff]
    %v1035 = vld [vmem:[#allocation8 + $0x238] sm:$0xff]
    %v1036 = vld [vmem:[#allocation8 + $0x240] sm:$0xff]
    %v1037 = vld [vmem:[#allocation8 + $0x248] sm:$0xff]
    %v1038 = vld [vmem:[#allocation8 + $0x250] sm:$0xff]
    %v1039 = vld [vmem:[#allocation8 + $0x258] sm:$0xff]
    %v1040 = vld [vmem:[#allocation8 + $0x260] sm:$0xff]
    %v1041 = vld [vmem:[#allocation8 + $0x268] sm:$0xff]
    %v1042 = vld [vmem:[#allocation8 + $0x270] sm:$0xff]
    %v1043 = vld [vmem:[#allocation8 + $0x278] sm:$0xff]
    %v1044 = vld [vmem:[#allocation8 + $0x280] sm:$0xff]
    %v1045 = vld [vmem:[#allocation8 + $0x288] sm:$0xff]
    %v1046 = vld [vmem:[#allocation8 + $0x290] sm:$0xff]
    %v1047 = vld [vmem:[#allocation8 + $0x298] sm:$0xff]
    %v1048 = vld [vmem:[#allocation8 + $0x2a0] sm:$0xff]
    %v1049 = vld [vmem:[#allocation8 + $0x2a8] sm:$0xff]
    %v1050 = vld [vmem:[#allocation8 + $0x2b0] sm:$0xff]
    %v1051 = vld [vmem:[#allocation8 + $0x2b8] sm:$0xff]
    %v1052 = vld [vmem:[#allocation8 + $0x2c0] sm:$0xff]
    %v1053 = vld [vmem:[#allocation8 + $0x2c8] sm:$0xff]
    %v1054 = vld [vmem:[#allocation8 + $0x2d0] sm:$0xff]
    %v1055 = vld [vmem:[#allocation8 + $0x2d8] sm:$0xff]
    %v1056 = vld [vmem:[#allocation8 + $0x2e0] sm:$0xff]
    %v1057 = vld [vmem:[#allocation8 + $0x2e8] sm:$0xff]
    %v1058 = vld [vmem:[#allocation8 + $0x2f0] sm:$0xff]
    %v1059 = vld [vmem:[#allocation8 + $0x2f8] sm:$0xff]
    %v1060 = vld [vmem:[#allocation8 + $0x300] sm:$0xff]
    %v1061 = vld [vmem:[#allocation8 + $0x308] sm:$0xff]
    %v1062 = vld [vmem:[#allocation8 + $0x310] sm:$0xff]
    %v1063 = vld [vmem:[#allocation8 + $0x318] sm:$0xff]
    %v1064 = vld [vmem:[#allocation8 + $0x320] sm:$0xff]
    %v1065 = vld [vmem:[#allocation8 + $0x328] sm:$0xff]
    %v1066 = vld [vmem:[#allocation8 + $0x330] sm:$0xff]
    %v1067 = vld [vmem:[#allocation8 + $0x338] sm:$0xff]
    %v1068 = vld [vmem:[#allocation8 + $0x340] sm:$0xff]
    %v1069 = vld [vmem:[#allocation8 + $0x348] sm:$0xff]
    %v1070 = vld [vmem:[#allocation8 + $0x350] sm:$0xff]
    %v1071 = vld [vmem:[#allocation8 + $0x358] sm:$0xff]
    %v1072 = vld [vmem:[#allocation8 + $0x360] sm:$0xff]
    %v1073 = vld [vmem:[#allocation8 + $0x368] sm:$0xff]
    %v1074 = vld [vmem:[#allocation8 + $0x370] sm:$0xff]
    %v1075 = vld [vmem:[#allocation8 + $0x378] sm:$0xff]
    %v1076 = vld [vmem:[#allocation8 + $0x380] sm:$0xff]
    %v1077 = vld [vmem:[#allocation8 + $0x388] sm:$0xff]
    %v1078 = vld [vmem:[#allocation8 + $0x390] sm:$0xff]
    %v1079 = vld [vmem:[#allocation8 + $0x398] sm:$0xff]
    %v1080 = vld [vmem:[#allocation8 + $0x3a0] sm:$0xff]
    %v1081 = vld [vmem:[#allocation8 + $0x3a8] sm:$0xff]
    %v1082 = vld [vmem:[#allocation8 + $0x3b0] sm:$0xff]
    %v1083 = vld [vmem:[#allocation8 + $0x3b8] sm:$0xff]
    %v1084 = vld [vmem:[#allocation8 + $0x3c0] sm:$0xff]
    %v1085 = vld [vmem:[#allocation8 + $0x3c8] sm:$0xff]
    %v1086 = vld [vmem:[#allocation8 + $0x3d0] sm:$0xff]
    %v1087 = vld [vmem:[#allocation8 + $0x3d8] sm:$0xff]
    %v1088 = vld [vmem:[#allocation8 + $0x3e0] sm:$0xff]
    %v1089 = vld [vmem:[#allocation8 + $0x3e8] sm:$0xff]
    %v1090 = vld [vmem:[#allocation8 + $0x3f0] sm:$0xff]
    %v1091 = vld [vmem:[#allocation8 + $0x3f8] sm:$0xff]
    %v1092 = vld [vmem:[#allocation8 + $0x400] sm:$0xff]
    %v1093 = vld [vmem:[#allocation8 + $0x408] sm:$0xff]
    %v1094 = vld [vmem:[#allocation8 + $0x410] sm:$0xff]
    %v1095 = vld [vmem:[#allocation8 + $0x418] sm:$0xff]
    %v1096 = vld [vmem:[#allocation8 + $0x420] sm:$0xff]
    %v1097 = vld [vmem:[#allocation8 + $0x428] sm:$0xff]
    %v1098 = vld [vmem:[#allocation8 + $0x430] sm:$0xff]
    %v1099 = vld [vmem:[#allocation8 + $0x438] sm:$0xff]
    %v1100 = vld [vmem:[#allocation8 + $0x440] sm:$0xff]
    %v1101 = vld [vmem:[#allocation8 + $0x448] sm:$0xff]
    %v1102 = vld [vmem:[#allocation8 + $0x450] sm:$0xff]
    %v1103 = vld [vmem:[#allocation8 + $0x458] sm:$0xff]
    %v1104 = vld [vmem:[#allocation8 + $0x460] sm:$0xff]
    %v1105 = vld [vmem:[#allocation8 + $0x468] sm:$0xff]
    %v1106 = vld [vmem:[#allocation8 + $0x470] sm:$0xff]
    %v1107 = vld [vmem:[#allocation8 + $0x478] sm:$0xff]
    %v1108 = vld [vmem:[#allocation8 + $0x480] sm:$0xff]
    %v1109 = vld [vmem:[#allocation8 + $0x488] sm:$0xff]
    %v1110 = vld [vmem:[#allocation8 + $0x490] sm:$0xff]
    %v1111 = vld [vmem:[#allocation8 + $0x498] sm:$0xff]
    %v1112 = vld [vmem:[#allocation8 + $0x4a0] sm:$0xff]
    %v1113 = vld [vmem:[#allocation8 + $0x4a8] sm:$0xff]
    %v1114 = vld [vmem:[#allocation8 + $0x4b0] sm:$0xff]
    %v1115 = vld [vmem:[#allocation8 + $0x4b8] sm:$0xff]
    %v1116 = vld [vmem:[#allocation8 + $0x4c0] sm:$0xff]
    %v1117 = vld [vmem:[#allocation8 + $0x4c8] sm:$0xff]
    %v1118 = vld [vmem:[#allocation8 + $0x4d0] sm:$0xff]
    %v1119 = vld [vmem:[#allocation8 + $0x4d8] sm:$0xff]
    %v1120 = vld [vmem:[#allocation8 + $0x4e0] sm:$0xff]
    %v1121 = vld [vmem:[#allocation8 + $0x4e8] sm:$0xff]
    %v1122 = vld [vmem:[#allocation8 + $0x4f0] sm:$0xff]
    %v1123 = vld [vmem:[#allocation8 + $0x4f8] sm:$0xff]
    %v1124 = vld [vmem:[#allocation8 + $0x500] sm:$0xff]
    %v1125 = vld [vmem:[#allocation8 + $0x508] sm:$0xff]
    %v1126 = vld [vmem:[#allocation8 + $0x510] sm:$0xff]
    %v1127 = vld [vmem:[#allocation8 + $0x518] sm:$0xff]
    %v1128 = vld [vmem:[#allocation8 + $0x520] sm:$0xff]
    %v1129 = vld [vmem:[#allocation8 + $0x528] sm:$0xff]
    %v1130 = vld [vmem:[#allocation8 + $0x530] sm:$0xff]
    %v1131 = vld [vmem:[#allocation8 + $0x538] sm:$0xff]
    %v1132 = vld [vmem:[#allocation8 + $0x540] sm:$0xff]
    %v1133 = vld [vmem:[#allocation8 + $0x548] sm:$0xff]
    %v1134 = vld [vmem:[#allocation8 + $0x550] sm:$0xff]
    %v1135 = vld [vmem:[#allocation8 + $0x558] sm:$0xff]
    %v1136 = vld [vmem:[#allocation8 + $0x560] sm:$0xff]
    %v1137 = vld [vmem:[#allocation8 + $0x568] sm:$0xff]
    %v1138 = vld [vmem:[#allocation8 + $0x570] sm:$0xff]
    %v1139 = vld [vmem:[#allocation8 + $0x578] sm:$0xff]
    %v1140 = vld [vmem:[#allocation8 + $0x580] sm:$0xff]
    %v1141 = vld [vmem:[#allocation8 + $0x588] sm:$0xff]
    %v1142 = vld [vmem:[#allocation8 + $0x590] sm:$0xff]
    %v1143 = vld [vmem:[#allocation8 + $0x598] sm:$0xff]
    %v1144 = vld [vmem:[#allocation8 + $0x5a0] sm:$0xff]
    %v1145 = vld [vmem:[#allocation8 + $0x5a8] sm:$0xff]
    %v1146 = vld [vmem:[#allocation8 + $0x5b0] sm:$0xff]
    %v1147 = vld [vmem:[#allocation8 + $0x5b8] sm:$0xff]
    %v1148 = vld [vmem:[#allocation8 + $0x5c0] sm:$0xff]
    %v1149 = vld [vmem:[#allocation8 + $0x5c8] sm:$0xff]
    %v1150 = vld [vmem:[#allocation8 + $0x5d0] sm:$0xff]
    %v1151 = vld [vmem:[#allocation8 + $0x5d8] sm:$0xff]
    %v1152 = vld [vmem:[#allocation8 + $0x5e0] sm:$0xff]
    %v1153 = vld [vmem:[#allocation8 + $0x5e8] sm:$0xff]
    %v1154 = vld [vmem:[#allocation8 + $0x5f0] sm:$0xff]
    %v1155 = vld [vmem:[#allocation8 + $0x5f8] sm:$0xff]
    %v1156 = vld [vmem:[#allocation8 + $0x600] sm:$0xff]
    %v1157 = vld [vmem:[#allocation8 + $0x608] sm:$0xff]
    %v1158 = vld [vmem:[#allocation8 + $0x610] sm:$0xff]
    %v1159 = vld [vmem:[#allocation8 + $0x618] sm:$0xff]
    %v1160 = vld [vmem:[#allocation8 + $0x620] sm:$0xff]
    %v1161 = vld [vmem:[#allocation8 + $0x628] sm:$0xff]
    %v1162 = vld [vmem:[#allocation8 + $0x630] sm:$0xff]
    %v1163 = vld [vmem:[#allocation8 + $0x638] sm:$0xff]
    %v1164 = vld [vmem:[#allocation8 + $0x640] sm:$0xff]
    %v1165 = vld [vmem:[#allocation8 + $0x648] sm:$0xff]
    %v1166 = vld [vmem:[#allocation8 + $0x650] sm:$0xff]
    %v1167 = vld [vmem:[#allocation8 + $0x658] sm:$0xff]
    %v1168 = vld [vmem:[#allocation8 + $0x660] sm:$0xff]
    %v1169 = vld [vmem:[#allocation8 + $0x668] sm:$0xff]
    %v1170 = vld [vmem:[#allocation8 + $0x670] sm:$0xff]
    %v1171 = vld [vmem:[#allocation8 + $0x678] sm:$0xff]
    %v1172 = vld [vmem:[#allocation8 + $0x680] sm:$0xff]
    %v1173 = vld [vmem:[#allocation8 + $0x688] sm:$0xff]
    %v1174 = vld [vmem:[#allocation8 + $0x690] sm:$0xff]
    %v1175 = vld [vmem:[#allocation8 + $0x698] sm:$0xff]
    %v1176 = vld [vmem:[#allocation8 + $0x6a0] sm:$0xff]
    %v1177 = vld [vmem:[#allocation8 + $0x6a8] sm:$0xff]
    %v1178 = vld [vmem:[#allocation8 + $0x6b0] sm:$0xff]
    %v1179 = vld [vmem:[#allocation8 + $0x6b8] sm:$0xff]
    %v1180 = vld [vmem:[#allocation8 + $0x6c0] sm:$0xff]
    %v1181 = vld [vmem:[#allocation8 + $0x6c8] sm:$0xff]
    %v1182 = vld [vmem:[#allocation8 + $0x6d0] sm:$0xff]
    %v1183 = vld [vmem:[#allocation8 + $0x6d8] sm:$0xff]
    %v1184 = vld [vmem:[#allocation8 + $0x6e0] sm:$0xff]
    %v1185 = vld [vmem:[#allocation8 + $0x6e8] sm:$0xff]
    %v1186 = vld [vmem:[#allocation8 + $0x6f0] sm:$0xff]
    %v1187 = vld [vmem:[#allocation8 + $0x6f8] sm:$0xff]
    %v1188 = vld [vmem:[#allocation8 + $0x700] sm:$0xff]
    %v1189 = vld [vmem:[#allocation8 + $0x708] sm:$0xff]
    %v1190 = vld [vmem:[#allocation8 + $0x710] sm:$0xff]
    %v1191 = vld [vmem:[#allocation8 + $0x718] sm:$0xff]
    %v1192 = vld [vmem:[#allocation8 + $0x720] sm:$0xff]
    %v1193 = vld [vmem:[#allocation8 + $0x728] sm:$0xff]
    %v1194 = vld [vmem:[#allocation8 + $0x730] sm:$0xff]
    %v1195 = vld [vmem:[#allocation8 + $0x738] sm:$0xff]
    %v1196 = vld [vmem:[#allocation8 + $0x740] sm:$0xff]
    %v1197 = vld [vmem:[#allocation8 + $0x748] sm:$0xff]
    %v1198 = vld [vmem:[#allocation8 + $0x750] sm:$0xff]
    %v1199 = vld [vmem:[#allocation8 + $0x758] sm:$0xff]
    %v1200 = vld [vmem:[#allocation8 + $0x760] sm:$0xff]
    %v1201 = vld [vmem:[#allocation8 + $0x768] sm:$0xff]
    %v1202 = vld [vmem:[#allocation8 + $0x770] sm:$0xff]
    %v1203 = vld [vmem:[#allocation8 + $0x778] sm:$0xff]
    %v1204 = vld [vmem:[#allocation8 + $0x780] sm:$0xff]
    %v1205 = vld [vmem:[#allocation8 + $0x788] sm:$0xff]
    %v1206 = vld [vmem:[#allocation8 + $0x790] sm:$0xff]
    %v1207 = vld [vmem:[#allocation8 + $0x798] sm:$0xff]
    %v1208 = vld [vmem:[#allocation8 + $0x7a0] sm:$0xff]
    %v1209 = vld [vmem:[#allocation8 + $0x7a8] sm:$0xff]
    %v1210 = vld [vmem:[#allocation8 + $0x7b0] sm:$0xff]
    %v1211 = vld [vmem:[#allocation8 + $0x7b8] sm:$0xff]
    %v1212 = vld [vmem:[#allocation8 + $0x7c0] sm:$0xff]
    %v1213 = vld [vmem:[#allocation8 + $0x7c8] sm:$0xff]
    %v1214 = vld [vmem:[#allocation8 + $0x7d0] sm:$0xff]
    %v1215 = vld [vmem:[#allocation8 + $0x7d8] sm:$0xff]
    %v1216 = vld [vmem:[#allocation8 + $0x7e0] sm:$0xff]
    %v1217 = vld [vmem:[#allocation8 + $0x7e8] sm:$0xff]
    %v1218 = vld [vmem:[#allocation8 + $0x7f0] sm:$0xff]
    %v1219 = vld [vmem:[#allocation8 + $0x7f8] sm:$0xff]
    %v1220 = vld [vmem:[%s4] sm:$0xf]
    %v1222 = vlaneseq
    %v1223 = vshrl.u32 %v1222, 7
    %v1224 = vsub.s32 0, %v1223
    %v1225 = vrot.slane %v1220, %v1224
    %v1226 = vlaneseq
    %v1227 = vshrl.u32 %v1226, 7
    %v1228 = vsub.s32 1, %v1227
    %v1229 = vrot.slane %v1220, %v1228
    %v1230 = vlaneseq
    %v1231 = vshrl.u32 %v1230, 7
    %v1232 = vsub.s32 2, %v1231
    %v1233 = vrot.slane %v1220, %v1232
    %v1234 = vlaneseq
    %v1235 = vshrl.u32 %v1234, 7
    %v1236 = vsub.s32 3, %v1235
    %v1237 = vrot.slane %v1220, %v1236
    %v1498 = vunpack.c.l.b16 %v964
    %v1499 = vunpack.c.h.b16 %v964
    %v1500 = vunpack.c.l.b16 %v965
    %v1501 = vunpack.c.h.b16 %v965
    %v1502 = vunpack.c.l.b16 %v966
    %v1503 = vunpack.c.h.b16 %v966
    %v1504 = vunpack.c.l.b16 %v967
    %v1505 = vunpack.c.h.b16 %v967
    %v1506 = vunpack.c.l.b16 %v968
    %v1507 = vunpack.c.h.b16 %v968
    %v1508 = vunpack.c.l.b16 %v969
    %v1509 = vunpack.c.h.b16 %v969
    %v1510 = vunpack.c.l.b16 %v970
    %v1511 = vunpack.c.h.b16 %v970
    %v1512 = vunpack.c.l.b16 %v971
    %v1513 = vunpack.c.h.b16 %v971
    %v1514 = vunpack.c.l.b16 %v972
    %v1515 = vunpack.c.h.b16 %v972
    %v1516 = vunpack.c.l.b16 %v973
    %v1517 = vunpack.c.h.b16 %v973
    %v1518 = vunpack.c.l.b16 %v974
    %v1519 = vunpack.c.h.b16 %v974
    %v1520 = vunpack.c.l.b16 %v975
    %v1521 = vunpack.c.h.b16 %v975
    %v1522 = vunpack.c.l.b16 %v976
    %v1523 = vunpack.c.h.b16 %v976
    %v1524 = vunpack.c.l.b16 %v977
    %v1525 = vunpack.c.h.b16 %v977
    %v1526 = vunpack.c.l.b16 %v978
    %v1527 = vunpack.c.h.b16 %v978
    %v1528 = vunpack.c.l.b16 %v979
    %v1529 = vunpack.c.h.b16 %v979
    %v1530 = vunpack.c.l.b16 %v980
    %v1531 = vunpack.c.h.b16 %v980
    %v1532 = vunpack.c.l.b16 %v981
    %v1533 = vunpack.c.h.b16 %v981
    %v1534 = vunpack.c.l.b16 %v982
    %v1535 = vunpack.c.h.b16 %v982
    %v1536 = vunpack.c.l.b16 %v983
    %v1537 = vunpack.c.h.b16 %v983
    %v1538 = vunpack.c.l.b16 %v984
    %v1539 = vunpack.c.h.b16 %v984
    %v1540 = vunpack.c.l.b16 %v985
    %v1541 = vunpack.c.h.b16 %v985
    %v1542 = vunpack.c.l.b16 %v986
    %v1543 = vunpack.c.h.b16 %v986
    %v1544 = vunpack.c.l.b16 %v987
    %v1545 = vunpack.c.h.b16 %v987
    %v1546 = vunpack.c.l.b16 %v988
    %v1547 = vunpack.c.h.b16 %v988
    %v1548 = vunpack.c.l.b16 %v989
    %v1549 = vunpack.c.h.b16 %v989
    %v1550 = vunpack.c.l.b16 %v990
    %v1551 = vunpack.c.h.b16 %v990
    %v1552 = vunpack.c.l.b16 %v991
    %v1553 = vunpack.c.h.b16 %v991
    %v1554 = vunpack.c.l.b16 %v992
    %v1555 = vunpack.c.h.b16 %v992
    %v1556 = vunpack.c.l.b16 %v993
    %v1557 = vunpack.c.h.b16 %v993
    %v1558 = vunpack.c.l.b16 %v994
    %v1559 = vunpack.c.h.b16 %v994
    %v1560 = vunpack.c.l.b16 %v995
    %v1561 = vunpack.c.h.b16 %v995
    %v1562 = vunpack.c.l.b16 %v996
    %v1563 = vunpack.c.h.b16 %v996
    %v1564 = vunpack.c.l.b16 %v997
    %v1565 = vunpack.c.h.b16 %v997
    %v1566 = vunpack.c.l.b16 %v998
    %v1567 = vunpack.c.h.b16 %v998
    %v1568 = vunpack.c.l.b16 %v999
    %v1569 = vunpack.c.h.b16 %v999
    %v1570 = vunpack.c.l.b16 %v1000
    %v1571 = vunpack.c.h.b16 %v1000
    %v1572 = vunpack.c.l.b16 %v1001
    %v1573 = vunpack.c.h.b16 %v1001
    %v1574 = vunpack.c.l.b16 %v1002
    %v1575 = vunpack.c.h.b16 %v1002
    %v1576 = vunpack.c.l.b16 %v1003
    %v1577 = vunpack.c.h.b16 %v1003
    %v1578 = vunpack.c.l.b16 %v1004
    %v1579 = vunpack.c.h.b16 %v1004
    %v1580 = vunpack.c.l.b16 %v1005
    %v1581 = vunpack.c.h.b16 %v1005
    %v1582 = vunpack.c.l.b16 %v1006
    %v1583 = vunpack.c.h.b16 %v1006
    %v1584 = vunpack.c.l.b16 %v1007
    %v1585 = vunpack.c.h.b16 %v1007
    %v1586 = vunpack.c.l.b16 %v1008
    %v1587 = vunpack.c.h.b16 %v1008
    %v1588 = vunpack.c.l.b16 %v1009
    %v1589 = vunpack.c.h.b16 %v1009
    %v1590 = vunpack.c.l.b16 %v1010
    %v1591 = vunpack.c.h.b16 %v1010
    %v1592 = vunpack.c.l.b16 %v1011
    %v1593 = vunpack.c.h.b16 %v1011
    %v1594 = vunpack.c.l.b16 %v1012
    %v1595 = vunpack.c.h.b16 %v1012
    %v1596 = vunpack.c.l.b16 %v1013
    %v1597 = vunpack.c.h.b16 %v1013
    %v1598 = vunpack.c.l.b16 %v1014
    %v1599 = vunpack.c.h.b16 %v1014
    %v1600 = vunpack.c.l.b16 %v1015
    %v1601 = vunpack.c.h.b16 %v1015
    %v1602 = vunpack.c.l.b16 %v1016
    %v1603 = vunpack.c.h.b16 %v1016
    %v1604 = vunpack.c.l.b16 %v1017
    %v1605 = vunpack.c.h.b16 %v1017
    %v1606 = vunpack.c.l.b16 %v1018
    %v1607 = vunpack.c.h.b16 %v1018
    %v1608 = vunpack.c.l.b16 %v1019
    %v1609 = vunpack.c.h.b16 %v1019
    %v1610 = vunpack.c.l.b16 %v1020
    %v1611 = vunpack.c.h.b16 %v1020
    %v1612 = vunpack.c.l.b16 %v1021
    %v1613 = vunpack.c.h.b16 %v1021
    %v1614 = vunpack.c.l.b16 %v1022
    %v1615 = vunpack.c.h.b16 %v1022
    %v1616 = vunpack.c.l.b16 %v1023
    %v1617 = vunpack.c.h.b16 %v1023
    %v1618 = vunpack.c.l.b16 %v1024
    %v1619 = vunpack.c.h.b16 %v1024
    %v1620 = vunpack.c.l.b16 %v1025
    %v1621 = vunpack.c.h.b16 %v1025
    %v1622 = vunpack.c.l.b16 %v1026
    %v1623 = vunpack.c.h.b16 %v1026
    %v1624 = vunpack.c.l.b16 %v1027
    %v1625 = vunpack.c.h.b16 %v1027
    %v1626 = vunpack.c.l.b16 %v1028
    %v1627 = vunpack.c.h.b16 %v1028
    %v1628 = vunpack.c.l.b16 %v1029
    %v1629 = vunpack.c.h.b16 %v1029
    %v1630 = vunpack.c.l.b16 %v1030
    %v1631 = vunpack.c.h.b16 %v1030
    %v1632 = vunpack.c.l.b16 %v1031
    %v1633 = vunpack.c.h.b16 %v1031
    %v1634 = vunpack.c.l.b16 %v1032
    %v1635 = vunpack.c.h.b16 %v1032
    %v1636 = vunpack.c.l.b16 %v1033
    %v1637 = vunpack.c.h.b16 %v1033
    %v1638 = vunpack.c.l.b16 %v1034
    %v1639 = vunpack.c.h.b16 %v1034
    %v1640 = vunpack.c.l.b16 %v1035
    %v1641 = vunpack.c.h.b16 %v1035
    %v1642 = vunpack.c.l.b16 %v1036
    %v1643 = vunpack.c.h.b16 %v1036
    %v1644 = vunpack.c.l.b16 %v1037
    %v1645 = vunpack.c.h.b16 %v1037
    %v1646 = vunpack.c.l.b16 %v1038
    %v1647 = vunpack.c.h.b16 %v1038
    %v1648 = vunpack.c.l.b16 %v1039
    %v1649 = vunpack.c.h.b16 %v1039
    %v1650 = vunpack.c.l.b16 %v1040
    %v1651 = vunpack.c.h.b16 %v1040
    %v1652 = vunpack.c.l.b16 %v1041
    %v1653 = vunpack.c.h.b16 %v1041
    %v1654 = vunpack.c.l.b16 %v1042
    %v1655 = vunpack.c.h.b16 %v1042
    %v1656 = vunpack.c.l.b16 %v1043
    %v1657 = vunpack.c.h.b16 %v1043
    %v1658 = vunpack.c.l.b16 %v1044
    %v1659 = vunpack.c.h.b16 %v1044
    %v1660 = vunpack.c.l.b16 %v1045
    %v1661 = vunpack.c.h.b16 %v1045
    %v1662 = vunpack.c.l.b16 %v1046
    %v1663 = vunpack.c.h.b16 %v1046
    %v1664 = vunpack.c.l.b16 %v1047
    %v1665 = vunpack.c.h.b16 %v1047
    %v1666 = vunpack.c.l.b16 %v1048
    %v1667 = vunpack.c.h.b16 %v1048
    %v1668 = vunpack.c.l.b16 %v1049
    %v1669 = vunpack.c.h.b16 %v1049
    %v1670 = vunpack.c.l.b16 %v1050
    %v1671 = vunpack.c.h.b16 %v1050
    %v1672 = vunpack.c.l.b16 %v1051
    %v1673 = vunpack.c.h.b16 %v1051
    %v1674 = vunpack.c.l.b16 %v1052
    %v1675 = vunpack.c.h.b16 %v1052
    %v1676 = vunpack.c.l.b16 %v1053
    %v1677 = vunpack.c.h.b16 %v1053
    %v1678 = vunpack.c.l.b16 %v1054
    %v1679 = vunpack.c.h.b16 %v1054
    %v1680 = vunpack.c.l.b16 %v1055
    %v1681 = vunpack.c.h.b16 %v1055
    %v1682 = vunpack.c.l.b16 %v1056
    %v1683 = vunpack.c.h.b16 %v1056
    %v1684 = vunpack.c.l.b16 %v1057
    %v1685 = vunpack.c.h.b16 %v1057
    %v1686 = vunpack.c.l.b16 %v1058
    %v1687 = vunpack.c.h.b16 %v1058
    %v1688 = vunpack.c.l.b16 %v1059
    %v1689 = vunpack.c.h.b16 %v1059
    %v1690 = vunpack.c.l.b16 %v1060
    %v1691 = vunpack.c.h.b16 %v1060
    %v1692 = vunpack.c.l.b16 %v1061
    %v1693 = vunpack.c.h.b16 %v1061
    %v1694 = vunpack.c.l.b16 %v1062
    %v1695 = vunpack.c.h.b16 %v1062
    %v1696 = vunpack.c.l.b16 %v1063
    %v1697 = vunpack.c.h.b16 %v1063
    %v1698 = vunpack.c.l.b16 %v1064
    %v1699 = vunpack.c.h.b16 %v1064
    %v1700 = vunpack.c.l.b16 %v1065
    %v1701 = vunpack.c.h.b16 %v1065
    %v1702 = vunpack.c.l.b16 %v1066
    %v1703 = vunpack.c.h.b16 %v1066
    %v1704 = vunpack.c.l.b16 %v1067
    %v1705 = vunpack.c.h.b16 %v1067
    %v1706 = vunpack.c.l.b16 %v1068
    %v1707 = vunpack.c.h.b16 %v1068
    %v1708 = vunpack.c.l.b16 %v1069
    %v1709 = vunpack.c.h.b16 %v1069
    %v1710 = vunpack.c.l.b16 %v1070
    %v1711 = vunpack.c.h.b16 %v1070
    %v1712 = vunpack.c.l.b16 %v1071
    %v1713 = vunpack.c.h.b16 %v1071
    %v1714 = vunpack.c.l.b16 %v1072
    %v1715 = vunpack.c.h.b16 %v1072
    %v1716 = vunpack.c.l.b16 %v1073
    %v1717 = vunpack.c.h.b16 %v1073
    %v1718 = vunpack.c.l.b16 %v1074
    %v1719 = vunpack.c.h.b16 %v1074
    %v1720 = vunpack.c.l.b16 %v1075
    %v1721 = vunpack.c.h.b16 %v1075
    %v1722 = vunpack.c.l.b16 %v1076
    %v1723 = vunpack.c.h.b16 %v1076
    %v1724 = vunpack.c.l.b16 %v1077
    %v1725 = vunpack.c.h.b16 %v1077
    %v1726 = vunpack.c.l.b16 %v1078
    %v1727 = vunpack.c.h.b16 %v1078
    %v1728 = vunpack.c.l.b16 %v1079
    %v1729 = vunpack.c.h.b16 %v1079
    %v1730 = vunpack.c.l.b16 %v1080
    %v1731 = vunpack.c.h.b16 %v1080
    %v1732 = vunpack.c.l.b16 %v1081
    %v1733 = vunpack.c.h.b16 %v1081
    %v1734 = vunpack.c.l.b16 %v1082
    %v1735 = vunpack.c.h.b16 %v1082
    %v1736 = vunpack.c.l.b16 %v1083
    %v1737 = vunpack.c.h.b16 %v1083
    %v1738 = vunpack.c.l.b16 %v1084
    %v1739 = vunpack.c.h.b16 %v1084
    %v1740 = vunpack.c.l.b16 %v1085
    %v1741 = vunpack.c.h.b16 %v1085
    %v1742 = vunpack.c.l.b16 %v1086
    %v1743 = vunpack.c.h.b16 %v1086
    %v1744 = vunpack.c.l.b16 %v1087
    %v1745 = vunpack.c.h.b16 %v1087
    %v1746 = vunpack.c.l.b16 %v1088
    %v1747 = vunpack.c.h.b16 %v1088
    %v1748 = vunpack.c.l.b16 %v1089
    %v1749 = vunpack.c.h.b16 %v1089
    %v1750 = vunpack.c.l.b16 %v1090
    %v1751 = vunpack.c.h.b16 %v1090
    %v1752 = vunpack.c.l.b16 %v1091
    %v1753 = vunpack.c.h.b16 %v1091
    %v1754 = vunpack.c.l.b16 %v1092
    %v1755 = vunpack.c.h.b16 %v1092
    %v1756 = vunpack.c.l.b16 %v1093
    %v1757 = vunpack.c.h.b16 %v1093
    %v1758 = vunpack.c.l.b16 %v1094
    %v1759 = vunpack.c.h.b16 %v1094
    %v1760 = vunpack.c.l.b16 %v1095
    %v1761 = vunpack.c.h.b16 %v1095
    %v1762 = vunpack.c.l.b16 %v1096
    %v1763 = vunpack.c.h.b16 %v1096
    %v1764 = vunpack.c.l.b16 %v1097
    %v1765 = vunpack.c.h.b16 %v1097
    %v1766 = vunpack.c.l.b16 %v1098
    %v1767 = vunpack.c.h.b16 %v1098
    %v1768 = vunpack.c.l.b16 %v1099
    %v1769 = vunpack.c.h.b16 %v1099
    %v1770 = vunpack.c.l.b16 %v1100
    %v1771 = vunpack.c.h.b16 %v1100
    %v1772 = vunpack.c.l.b16 %v1101
    %v1773 = vunpack.c.h.b16 %v1101
    %v1774 = vunpack.c.l.b16 %v1102
    %v1775 = vunpack.c.h.b16 %v1102
    %v1776 = vunpack.c.l.b16 %v1103
    %v1777 = vunpack.c.h.b16 %v1103
    %v1778 = vunpack.c.l.b16 %v1104
    %v1779 = vunpack.c.h.b16 %v1104
    %v1780 = vunpack.c.l.b16 %v1105
    %v1781 = vunpack.c.h.b16 %v1105
    %v1782 = vunpack.c.l.b16 %v1106
    %v1783 = vunpack.c.h.b16 %v1106
    %v1784 = vunpack.c.l.b16 %v1107
    %v1785 = vunpack.c.h.b16 %v1107
    %v1786 = vunpack.c.l.b16 %v1108
    %v1787 = vunpack.c.h.b16 %v1108
    %v1788 = vunpack.c.l.b16 %v1109
    %v1789 = vunpack.c.h.b16 %v1109
    %v1790 = vunpack.c.l.b16 %v1110
    %v1791 = vunpack.c.h.b16 %v1110
    %v1792 = vunpack.c.l.b16 %v1111
    %v1793 = vunpack.c.h.b16 %v1111
    %v1794 = vunpack.c.l.b16 %v1112
    %v1795 = vunpack.c.h.b16 %v1112
    %v1796 = vunpack.c.l.b16 %v1113
    %v1797 = vunpack.c.h.b16 %v1113
    %v1798 = vunpack.c.l.b16 %v1114
    %v1799 = vunpack.c.h.b16 %v1114
    %v1800 = vunpack.c.l.b16 %v1115
    %v1801 = vunpack.c.h.b16 %v1115
    %v1802 = vunpack.c.l.b16 %v1116
    %v1803 = vunpack.c.h.b16 %v1116
    %v1804 = vunpack.c.l.b16 %v1117
    %v1805 = vunpack.c.h.b16 %v1117
    %v1806 = vunpack.c.l.b16 %v1118
    %v1807 = vunpack.c.h.b16 %v1118
    %v1808 = vunpack.c.l.b16 %v1119
    %v1809 = vunpack.c.h.b16 %v1119
    %v1810 = vunpack.c.l.b16 %v1120
    %v1811 = vunpack.c.h.b16 %v1120
    %v1812 = vunpack.c.l.b16 %v1121
    %v1813 = vunpack.c.h.b16 %v1121
    %v1814 = vunpack.c.l.b16 %v1122
    %v1815 = vunpack.c.h.b16 %v1122
    %v1816 = vunpack.c.l.b16 %v1123
    %v1817 = vunpack.c.h.b16 %v1123
    %v1818 = vunpack.c.l.b16 %v1124
    %v1819 = vunpack.c.h.b16 %v1124
    %v1820 = vunpack.c.l.b16 %v1125
    %v1821 = vunpack.c.h.b16 %v1125
    %v1822 = vunpack.c.l.b16 %v1126
    %v1823 = vunpack.c.h.b16 %v1126
    %v1824 = vunpack.c.l.b16 %v1127
    %v1825 = vunpack.c.h.b16 %v1127
    %v1826 = vunpack.c.l.b16 %v1128
    %v1827 = vunpack.c.h.b16 %v1128
    %v1828 = vunpack.c.l.b16 %v1129
    %v1829 = vunpack.c.h.b16 %v1129
    %v1830 = vunpack.c.l.b16 %v1130
    %v1831 = vunpack.c.h.b16 %v1130
    %v1832 = vunpack.c.l.b16 %v1131
    %v1833 = vunpack.c.h.b16 %v1131
    %v1834 = vunpack.c.l.b16 %v1132
    %v1835 = vunpack.c.h.b16 %v1132
    %v1836 = vunpack.c.l.b16 %v1133
    %v1837 = vunpack.c.h.b16 %v1133
    %v1838 = vunpack.c.l.b16 %v1134
    %v1839 = vunpack.c.h.b16 %v1134
    %v1840 = vunpack.c.l.b16 %v1135
    %v1841 = vunpack.c.h.b16 %v1135
    %v1842 = vunpack.c.l.b16 %v1136
    %v1843 = vunpack.c.h.b16 %v1136
    %v1844 = vunpack.c.l.b16 %v1137
    %v1845 = vunpack.c.h.b16 %v1137
    %v1846 = vunpack.c.l.b16 %v1138
    %v1847 = vunpack.c.h.b16 %v1138
    %v1848 = vunpack.c.l.b16 %v1139
    %v1849 = vunpack.c.h.b16 %v1139
    %v1850 = vunpack.c.l.b16 %v1140
    %v1851 = vunpack.c.h.b16 %v1140
    %v1852 = vunpack.c.l.b16 %v1141
    %v1853 = vunpack.c.h.b16 %v1141
    %v1854 = vunpack.c.l.b16 %v1142
    %v1855 = vunpack.c.h.b16 %v1142
    %v1856 = vunpack.c.l.b16 %v1143
    %v1857 = vunpack.c.h.b16 %v1143
    %v1858 = vunpack.c.l.b16 %v1144
    %v1859 = vunpack.c.h.b16 %v1144
    %v1860 = vunpack.c.l.b16 %v1145
    %v1861 = vunpack.c.h.b16 %v1145
    %v1862 = vunpack.c.l.b16 %v1146
    %v1863 = vunpack.c.h.b16 %v1146
    %v1864 = vunpack.c.l.b16 %v1147
    %v1865 = vunpack.c.h.b16 %v1147
    %v1866 = vunpack.c.l.b16 %v1148
    %v1867 = vunpack.c.h.b16 %v1148
    %v1868 = vunpack.c.l.b16 %v1149
    %v1869 = vunpack.c.h.b16 %v1149
    %v1870 = vunpack.c.l.b16 %v1150
    %v1871 = vunpack.c.h.b16 %v1150
    %v1872 = vunpack.c.l.b16 %v1151
    %v1873 = vunpack.c.h.b16 %v1151
    %v1874 = vunpack.c.l.b16 %v1152
    %v1875 = vunpack.c.h.b16 %v1152
    %v1876 = vunpack.c.l.b16 %v1153
    %v1877 = vunpack.c.h.b16 %v1153
    %v1878 = vunpack.c.l.b16 %v1154
    %v1879 = vunpack.c.h.b16 %v1154
    %v1880 = vunpack.c.l.b16 %v1155
    %v1881 = vunpack.c.h.b16 %v1155
    %v1882 = vunpack.c.l.b16 %v1156
    %v1883 = vunpack.c.h.b16 %v1156
    %v1884 = vunpack.c.l.b16 %v1157
    %v1885 = vunpack.c.h.b16 %v1157
    %v1886 = vunpack.c.l.b16 %v1158
    %v1887 = vunpack.c.h.b16 %v1158
    %v1888 = vunpack.c.l.b16 %v1159
    %v1889 = vunpack.c.h.b16 %v1159
    %v1890 = vunpack.c.l.b16 %v1160
    %v1891 = vunpack.c.h.b16 %v1160
    %v1892 = vunpack.c.l.b16 %v1161
    %v1893 = vunpack.c.h.b16 %v1161
    %v1894 = vunpack.c.l.b16 %v1162
    %v1895 = vunpack.c.h.b16 %v1162
    %v1896 = vunpack.c.l.b16 %v1163
    %v1897 = vunpack.c.h.b16 %v1163
    %v1898 = vunpack.c.l.b16 %v1164
    %v1899 = vunpack.c.h.b16 %v1164
    %v1900 = vunpack.c.l.b16 %v1165
    %v1901 = vunpack.c.h.b16 %v1165
    %v1902 = vunpack.c.l.b16 %v1166
    %v1903 = vunpack.c.h.b16 %v1166
    %v1904 = vunpack.c.l.b16 %v1167
    %v1905 = vunpack.c.h.b16 %v1167
    %v1906 = vunpack.c.l.b16 %v1168
    %v1907 = vunpack.c.h.b16 %v1168
    %v1908 = vunpack.c.l.b16 %v1169
    %v1909 = vunpack.c.h.b16 %v1169
    %v1910 = vunpack.c.l.b16 %v1170
    %v1911 = vunpack.c.h.b16 %v1170
    %v1912 = vunpack.c.l.b16 %v1171
    %v1913 = vunpack.c.h.b16 %v1171
    %v1914 = vunpack.c.l.b16 %v1172
    %v1915 = vunpack.c.h.b16 %v1172
    %v1916 = vunpack.c.l.b16 %v1173
    %v1917 = vunpack.c.h.b16 %v1173
    %v1918 = vunpack.c.l.b16 %v1174
    %v1919 = vunpack.c.h.b16 %v1174
    %v1920 = vunpack.c.l.b16 %v1175
    %v1921 = vunpack.c.h.b16 %v1175
    %v1922 = vunpack.c.l.b16 %v1176
    %v1923 = vunpack.c.h.b16 %v1176
    %v1924 = vunpack.c.l.b16 %v1177
    %v1925 = vunpack.c.h.b16 %v1177
    %v1926 = vunpack.c.l.b16 %v1178
    %v1927 = vunpack.c.h.b16 %v1178
    %v1928 = vunpack.c.l.b16 %v1179
    %v1929 = vunpack.c.h.b16 %v1179
    %v1930 = vunpack.c.l.b16 %v1180
    %v1931 = vunpack.c.h.b16 %v1180
    %v1932 = vunpack.c.l.b16 %v1181
    %v1933 = vunpack.c.h.b16 %v1181
    %v1934 = vunpack.c.l.b16 %v1182
    %v1935 = vunpack.c.h.b16 %v1182
    %v1936 = vunpack.c.l.b16 %v1183
    %v1937 = vunpack.c.h.b16 %v1183
    %v1938 = vunpack.c.l.b16 %v1184
    %v1939 = vunpack.c.h.b16 %v1184
    %v1940 = vunpack.c.l.b16 %v1185
    %v1941 = vunpack.c.h.b16 %v1185
    %v1942 = vunpack.c.l.b16 %v1186
    %v1943 = vunpack.c.h.b16 %v1186
    %v1944 = vunpack.c.l.b16 %v1187
    %v1945 = vunpack.c.h.b16 %v1187
    %v1946 = vunpack.c.l.b16 %v1188
    %v1947 = vunpack.c.h.b16 %v1188
    %v1948 = vunpack.c.l.b16 %v1189
    %v1949 = vunpack.c.h.b16 %v1189
    %v1950 = vunpack.c.l.b16 %v1190
    %v1951 = vunpack.c.h.b16 %v1190
    %v1952 = vunpack.c.l.b16 %v1191
    %v1953 = vunpack.c.h.b16 %v1191
    %v1954 = vunpack.c.l.b16 %v1192
    %v1955 = vunpack.c.h.b16 %v1192
    %v1956 = vunpack.c.l.b16 %v1193
    %v1957 = vunpack.c.h.b16 %v1193
    %v1958 = vunpack.c.l.b16 %v1194
    %v1959 = vunpack.c.h.b16 %v1194
    %v1960 = vunpack.c.l.b16 %v1195
    %v1961 = vunpack.c.h.b16 %v1195
    %v1962 = vunpack.c.l.b16 %v1196
    %v1963 = vunpack.c.h.b16 %v1196
    %v1964 = vunpack.c.l.b16 %v1197
    %v1965 = vunpack.c.h.b16 %v1197
    %v1966 = vunpack.c.l.b16 %v1198
    %v1967 = vunpack.c.h.b16 %v1198
    %v1968 = vunpack.c.l.b16 %v1199
    %v1969 = vunpack.c.h.b16 %v1199
    %v1970 = vunpack.c.l.b16 %v1200
    %v1971 = vunpack.c.h.b16 %v1200
    %v1972 = vunpack.c.l.b16 %v1201
    %v1973 = vunpack.c.h.b16 %v1201
    %v1974 = vunpack.c.l.b16 %v1202
    %v1975 = vunpack.c.h.b16 %v1202
    %v1976 = vunpack.c.l.b16 %v1203
    %v1977 = vunpack.c.h.b16 %v1203
    %v1978 = vunpack.c.l.b16 %v1204
    %v1979 = vunpack.c.h.b16 %v1204
    %v1980 = vunpack.c.l.b16 %v1205
    %v1981 = vunpack.c.h.b16 %v1205
    %v1982 = vunpack.c.l.b16 %v1206
    %v1983 = vunpack.c.h.b16 %v1206
    %v1984 = vunpack.c.l.b16 %v1207
    %v1985 = vunpack.c.h.b16 %v1207
    %v1986 = vunpack.c.l.b16 %v1208
    %v1987 = vunpack.c.h.b16 %v1208
    %v1988 = vunpack.c.l.b16 %v1209
    %v1989 = vunpack.c.h.b16 %v1209
    %v1990 = vunpack.c.l.b16 %v1210
    %v1991 = vunpack.c.h.b16 %v1210
    %v1992 = vunpack.c.l.b16 %v1211
    %v1993 = vunpack.c.h.b16 %v1211
    %v1994 = vunpack.c.l.b16 %v1212
    %v1995 = vunpack.c.h.b16 %v1212
    %v1996 = vunpack.c.l.b16 %v1213
    %v1997 = vunpack.c.h.b16 %v1213
    %v1998 = vunpack.c.l.b16 %v1214
    %v1999 = vunpack.c.h.b16 %v1214
    %v2000 = vunpack.c.l.b16 %v1215
    %v2001 = vunpack.c.h.b16 %v1215
    %v2002 = vunpack.c.l.b16 %v1216
    %v2003 = vunpack.c.h.b16 %v1216
    %v2004 = vunpack.c.l.b16 %v1217
    %v2005 = vunpack.c.h.b16 %v1217
    %v2006 = vunpack.c.l.b16 %v1218
    %v2007 = vunpack.c.h.b16 %v1218
    %v2008 = vunpack.c.l.b16 %v1219
    %v2009 = vunpack.c.h.b16 %v1219
    %v2010 = vpack.c.b16 %v1502, %v1498
    %v2011 = vpack.c.b16 %v1503, %v1499
    %v2012 = vpack.c.b16 %v1504, %v1500
    %v2013 = vpack.c.b16 %v1505, %v1501
    %v2014 = vpack.c.b16 %v1510, %v1506
    %v2015 = vpack.c.b16 %v1511, %v1507
    %v2016 = vpack.c.b16 %v1512, %v1508
    %v2017 = vpack.c.b16 %v1513, %v1509
    %v2018 = vpack.c.b16 %v1518, %v1514
    %v2019 = vpack.c.b16 %v1519, %v1515
    %v2020 = vpack.c.b16 %v1520, %v1516
    %v2021 = vpack.c.b16 %v1521, %v1517
    %v2022 = vpack.c.b16 %v1526, %v1522
    %v2023 = vpack.c.b16 %v1527, %v1523
    %v2024 = vpack.c.b16 %v1528, %v1524
    %v2025 = vpack.c.b16 %v1529, %v1525
    %v2026 = vpack.c.b16 %v1534, %v1530
    %v2027 = vpack.c.b16 %v1535, %v1531
    %v2028 = vpack.c.b16 %v1536, %v1532
    %v2029 = vpack.c.b16 %v1537, %v1533
    %v2030 = vpack.c.b16 %v1542, %v1538
    %v2031 = vpack.c.b16 %v1543, %v1539
    %v2032 = vpack.c.b16 %v1544, %v1540
    %v2033 = vpack.c.b16 %v1545, %v1541
    %v2034 = vpack.c.b16 %v1550, %v1546
    %v2035 = vpack.c.b16 %v1551, %v1547
    %v2036 = vpack.c.b16 %v1552, %v1548
    %v2037 = vpack.c.b16 %v1553, %v1549
    %v2038 = vpack.c.b16 %v1558, %v1554
    %v2039 = vpack.c.b16 %v1559, %v1555
    %v2040 = vpack.c.b16 %v1560, %v1556
    %v2041 = vpack.c.b16 %v1561, %v1557
    %v2042 = vpack.c.b16 %v1566, %v1562
    %v2043 = vpack.c.b16 %v1567, %v1563
    %v2044 = vpack.c.b16 %v1568, %v1564
    %v2045 = vpack.c.b16 %v1569, %v1565
    %v2046 = vpack.c.b16 %v1574, %v1570
    %v2047 = vpack.c.b16 %v1575, %v1571
    %v2048 = vpack.c.b16 %v1576, %v1572
    %v2049 = vpack.c.b16 %v1577, %v1573
    %v2050 = vpack.c.b16 %v1582, %v1578
    %v2051 = vpack.c.b16 %v1583, %v1579
    %v2052 = vpack.c.b16 %v1584, %v1580
    %v2053 = vpack.c.b16 %v1585, %v1581
    %v2054 = vpack.c.b16 %v1590, %v1586
    %v2055 = vpack.c.b16 %v1591, %v1587
    %v2056 = vpack.c.b16 %v1592, %v1588
    %v2057 = vpack.c.b16 %v1593, %v1589
    %v2058 = vpack.c.b16 %v1598, %v1594
    %v2059 = vpack.c.b16 %v1599, %v1595
    %v2060 = vpack.c.b16 %v1600, %v1596
    %v2061 = vpack.c.b16 %v1601, %v1597
    %v2062 = vpack.c.b16 %v1606, %v1602
    %v2063 = vpack.c.b16 %v1607, %v1603
    %v2064 = vpack.c.b16 %v1608, %v1604
    %v2065 = vpack.c.b16 %v1609, %v1605
    %v2066 = vpack.c.b16 %v1614, %v1610
    %v2067 = vpack.c.b16 %v1615, %v1611
    %v2068 = vpack.c.b16 %v1616, %v1612
    %v2069 = vpack.c.b16 %v1617, %v1613
    %v2070 = vpack.c.b16 %v1622, %v1618
    %v2071 = vpack.c.b16 %v1623, %v1619
    %v2072 = vpack.c.b16 %v1624, %v1620
    %v2073 = vpack.c.b16 %v1625, %v1621
    %v2074 = vpack.c.b16 %v1630, %v1626
    %v2075 = vpack.c.b16 %v1631, %v1627
    %v2076 = vpack.c.b16 %v1632, %v1628
    %v2077 = vpack.c.b16 %v1633, %v1629
    %v2078 = vpack.c.b16 %v1638, %v1634
    %v2079 = vpack.c.b16 %v1639, %v1635
    %v2080 = vpack.c.b16 %v1640, %v1636
    %v2081 = vpack.c.b16 %v1641, %v1637
    %v2082 = vpack.c.b16 %v1646, %v1642
    %v2083 = vpack.c.b16 %v1647, %v1643
    %v2084 = vpack.c.b16 %v1648, %v1644
    %v2085 = vpack.c.b16 %v1649, %v1645
    %v2086 = vpack.c.b16 %v1654, %v1650
    %v2087 = vpack.c.b16 %v1655, %v1651
    %v2088 = vpack.c.b16 %v1656, %v1652
    %v2089 = vpack.c.b16 %v1657, %v1653
    %v2090 = vpack.c.b16 %v1662, %v1658
    %v2091 = vpack.c.b16 %v1663, %v1659
    %v2092 = vpack.c.b16 %v1664, %v1660
    %v2093 = vpack.c.b16 %v1665, %v1661
    %v2094 = vpack.c.b16 %v1670, %v1666
    %v2095 = vpack.c.b16 %v1671, %v1667
    %v2096 = vpack.c.b16 %v1672, %v1668
    %v2097 = vpack.c.b16 %v1673, %v1669
    %v2098 = vpack.c.b16 %v1678, %v1674
    %v2099 = vpack.c.b16 %v1679, %v1675
    %v2100 = vpack.c.b16 %v1680, %v1676
    %v2101 = vpack.c.b16 %v1681, %v1677
    %v2102 = vpack.c.b16 %v1686, %v1682
    %v2103 = vpack.c.b16 %v1687, %v1683
    %v2104 = vpack.c.b16 %v1688, %v1684
    %v2105 = vpack.c.b16 %v1689, %v1685
    %v2106 = vpack.c.b16 %v1694, %v1690
    %v2107 = vpack.c.b16 %v1695, %v1691
    %v2108 = vpack.c.b16 %v1696, %v1692
    %v2109 = vpack.c.b16 %v1697, %v1693
    %v2110 = vpack.c.b16 %v1702, %v1698
    %v2111 = vpack.c.b16 %v1703, %v1699
    %v2112 = vpack.c.b16 %v1704, %v1700
    %v2113 = vpack.c.b16 %v1705, %v1701
    %v2114 = vpack.c.b16 %v1710, %v1706
    %v2115 = vpack.c.b16 %v1711, %v1707
    %v2116 = vpack.c.b16 %v1712, %v1708
    %v2117 = vpack.c.b16 %v1713, %v1709
    %v2118 = vpack.c.b16 %v1718, %v1714
    %v2119 = vpack.c.b16 %v1719, %v1715
    %v2120 = vpack.c.b16 %v1720, %v1716
    %v2121 = vpack.c.b16 %v1721, %v1717
    %v2122 = vpack.c.b16 %v1726, %v1722
    %v2123 = vpack.c.b16 %v1727, %v1723
    %v2124 = vpack.c.b16 %v1728, %v1724
    %v2125 = vpack.c.b16 %v1729, %v1725
    %v2126 = vpack.c.b16 %v1734, %v1730
    %v2127 = vpack.c.b16 %v1735, %v1731
    %v2128 = vpack.c.b16 %v1736, %v1732
    %v2129 = vpack.c.b16 %v1737, %v1733
    %v2130 = vpack.c.b16 %v1742, %v1738
    %v2131 = vpack.c.b16 %v1743, %v1739
    %v2132 = vpack.c.b16 %v1744, %v1740
    %v2133 = vpack.c.b16 %v1745, %v1741
    %v2134 = vpack.c.b16 %v1750, %v1746
    %v2135 = vpack.c.b16 %v1751, %v1747
    %v2136 = vpack.c.b16 %v1752, %v1748
    %v2137 = vpack.c.b16 %v1753, %v1749
    %v2138 = vpack.c.b16 %v1758, %v1754
    %v2139 = vpack.c.b16 %v1759, %v1755
    %v2140 = vpack.c.b16 %v1760, %v1756
    %v2141 = vpack.c.b16 %v1761, %v1757
    %v2142 = vpack.c.b16 %v1766, %v1762
    %v2143 = vpack.c.b16 %v1767, %v1763
    %v2144 = vpack.c.b16 %v1768, %v1764
    %v2145 = vpack.c.b16 %v1769, %v1765
    %v2146 = vpack.c.b16 %v1774, %v1770
    %v2147 = vpack.c.b16 %v1775, %v1771
    %v2148 = vpack.c.b16 %v1776, %v1772
    %v2149 = vpack.c.b16 %v1777, %v1773
    %v2150 = vpack.c.b16 %v1782, %v1778
    %v2151 = vpack.c.b16 %v1783, %v1779
    %v2152 = vpack.c.b16 %v1784, %v1780
    %v2153 = vpack.c.b16 %v1785, %v1781
    %v2154 = vpack.c.b16 %v1790, %v1786
    %v2155 = vpack.c.b16 %v1791, %v1787
    %v2156 = vpack.c.b16 %v1792, %v1788
    %v2157 = vpack.c.b16 %v1793, %v1789
    %v2158 = vpack.c.b16 %v1798, %v1794
    %v2159 = vpack.c.b16 %v1799, %v1795
    %v2160 = vpack.c.b16 %v1800, %v1796
    %v2161 = vpack.c.b16 %v1801, %v1797
    %v2162 = vpack.c.b16 %v1806, %v1802
    %v2163 = vpack.c.b16 %v1807, %v1803
    %v2164 = vpack.c.b16 %v1808, %v1804
    %v2165 = vpack.c.b16 %v1809, %v1805
    %v2166 = vpack.c.b16 %v1814, %v1810
    %v2167 = vpack.c.b16 %v1815, %v1811
    %v2168 = vpack.c.b16 %v1816, %v1812
    %v2169 = vpack.c.b16 %v1817, %v1813
    %v2170 = vpack.c.b16 %v1822, %v1818
    %v2171 = vpack.c.b16 %v1823, %v1819
    %v2172 = vpack.c.b16 %v1824, %v1820
    %v2173 = vpack.c.b16 %v1825, %v1821
    %v2174 = vpack.c.b16 %v1830, %v1826
    %v2175 = vpack.c.b16 %v1831, %v1827
    %v2176 = vpack.c.b16 %v1832, %v1828
    %v2177 = vpack.c.b16 %v1833, %v1829
    %v2178 = vpack.c.b16 %v1838, %v1834
    %v2179 = vpack.c.b16 %v1839, %v1835
    %v2180 = vpack.c.b16 %v1840, %v1836
    %v2181 = vpack.c.b16 %v1841, %v1837
    %v2182 = vpack.c.b16 %v1846, %v1842
    %v2183 = vpack.c.b16 %v1847, %v1843
    %v2184 = vpack.c.b16 %v1848, %v1844
    %v2185 = vpack.c.b16 %v1849, %v1845
    %v2186 = vpack.c.b16 %v1854, %v1850
    %v2187 = vpack.c.b16 %v1855, %v1851
    %v2188 = vpack.c.b16 %v1856, %v1852
    %v2189 = vpack.c.b16 %v1857, %v1853
    %v2190 = vpack.c.b16 %v1862, %v1858
    %v2191 = vpack.c.b16 %v1863, %v1859
    %v2192 = vpack.c.b16 %v1864, %v1860
    %v2193 = vpack.c.b16 %v1865, %v1861
    %v2194 = vpack.c.b16 %v1870, %v1866
    %v2195 = vpack.c.b16 %v1871, %v1867
    %v2196 = vpack.c.b16 %v1872, %v1868
    %v2197 = vpack.c.b16 %v1873, %v1869
    %v2198 = vpack.c.b16 %v1878, %v1874
    %v2199 = vpack.c.b16 %v1879, %v1875
    %v2200 = vpack.c.b16 %v1880, %v1876
    %v2201 = vpack.c.b16 %v1881, %v1877
    %v2202 = vpack.c.b16 %v1886, %v1882
    %v2203 = vpack.c.b16 %v1887, %v1883
    %v2204 = vpack.c.b16 %v1888, %v1884
    %v2205 = vpack.c.b16 %v1889, %v1885
    %v2206 = vpack.c.b16 %v1894, %v1890
    %v2207 = vpack.c.b16 %v1895, %v1891
    %v2208 = vpack.c.b16 %v1896, %v1892
    %v2209 = vpack.c.b16 %v1897, %v1893
    %v2210 = vpack.c.b16 %v1902, %v1898
    %v2211 = vpack.c.b16 %v1903, %v1899
    %v2212 = vpack.c.b16 %v1904, %v1900
    %v2213 = vpack.c.b16 %v1905, %v1901
    %v2214 = vpack.c.b16 %v1910, %v1906
    %v2215 = vpack.c.b16 %v1911, %v1907
    %v2216 = vpack.c.b16 %v1912, %v1908
    %v2217 = vpack.c.b16 %v1913, %v1909
    %v2218 = vpack.c.b16 %v1918, %v1914
    %v2219 = vpack.c.b16 %v1919, %v1915
    %v2220 = vpack.c.b16 %v1920, %v1916
    %v2221 = vpack.c.b16 %v1921, %v1917
    %v2222 = vpack.c.b16 %v1926, %v1922
    %v2223 = vpack.c.b16 %v1927, %v1923
    %v2224 = vpack.c.b16 %v1928, %v1924
    %v2225 = vpack.c.b16 %v1929, %v1925
    %v2226 = vpack.c.b16 %v1934, %v1930
    %v2227 = vpack.c.b16 %v1935, %v1931
    %v2228 = vpack.c.b16 %v1936, %v1932
    %v2229 = vpack.c.b16 %v1937, %v1933
    %v2230 = vpack.c.b16 %v1942, %v1938
    %v2231 = vpack.c.b16 %v1943, %v1939
    %v2232 = vpack.c.b16 %v1944, %v1940
    %v2233 = vpack.c.b16 %v1945, %v1941
    %v2234 = vpack.c.b16 %v1950, %v1946
    %v2235 = vpack.c.b16 %v1951, %v1947
    %v2236 = vpack.c.b16 %v1952, %v1948
    %v2237 = vpack.c.b16 %v1953, %v1949
    %v2238 = vpack.c.b16 %v1958, %v1954
    %v2239 = vpack.c.b16 %v1959, %v1955
    %v2240 = vpack.c.b16 %v1960, %v1956
    %v2241 = vpack.c.b16 %v1961, %v1957
    %v2242 = vpack.c.b16 %v1966, %v1962
    %v2243 = vpack.c.b16 %v1967, %v1963
    %v2244 = vpack.c.b16 %v1968, %v1964
    %v2245 = vpack.c.b16 %v1969, %v1965
    %v2246 = vpack.c.b16 %v1974, %v1970
    %v2247 = vpack.c.b16 %v1975, %v1971
    %v2248 = vpack.c.b16 %v1976, %v1972
    %v2249 = vpack.c.b16 %v1977, %v1973
    %v2250 = vpack.c.b16 %v1982, %v1978
    %v2251 = vpack.c.b16 %v1983, %v1979
    %v2252 = vpack.c.b16 %v1984, %v1980
    %v2253 = vpack.c.b16 %v1985, %v1981
    %v2254 = vpack.c.b16 %v1990, %v1986
    %v2255 = vpack.c.b16 %v1991, %v1987
    %v2256 = vpack.c.b16 %v1992, %v1988
    %v2257 = vpack.c.b16 %v1993, %v1989
    %v2258 = vpack.c.b16 %v1998, %v1994
    %v2259 = vpack.c.b16 %v1999, %v1995
    %v2260 = vpack.c.b16 %v2000, %v1996
    %v2261 = vpack.c.b16 %v2001, %v1997
    %v2262 = vpack.c.b16 %v2006, %v2002
    %v2263 = vpack.c.b16 %v2007, %v2003
    %v2264 = vpack.c.b16 %v2008, %v2004
    %v2265 = vpack.c.b16 %v2009, %v2005
    %2522 = vmatprep.subr.bf16.mxu0 %v2011
    %2523 = vmatpush1.bf16.msra.mxu0 %v2010
    %2524 = vmatprep.subr.bf16.mxu0 %v2015
    %2525 = vmatpush1.bf16.msra.mxu0 %v2014
    %2526 = vmatprep.subr.bf16.mxu0 %v2019
    %2527 = vmatpush1.bf16.msra.mxu0 %v2018
    %2528 = vmatprep.subr.bf16.mxu0 %v2023
    %2529 = vmatpush1.bf16.msra.mxu0 %v2022
    %2530 = vmatprep.subr.bf16.mxu0 %v2027
    %2531 = vmatpush1.bf16.msra.mxu0 %v2026
    %2532 = vmatprep.subr.bf16.mxu0 %v2031
    %2533 = vmatpush1.bf16.msra.mxu0 %v2030
    %2534 = vmatprep.subr.bf16.mxu0 %v2035
    %2535 = vmatpush1.bf16.msra.mxu0 %v2034
    %2536 = vmatprep.subr.bf16.mxu0 %v2039
    %2537 = vmatpush1.bf16.msra.mxu0 %v2038
    %2538 = vmatprep.subr.bf16.mxu0 %v2043
    %2539 = vmatpush1.bf16.msra.mxu0 %v2042
    %2540 = vmatprep.subr.bf16.mxu0 %v2047
    %2541 = vmatpush1.bf16.msra.mxu0 %v2046
    %2542 = vmatprep.subr.bf16.mxu0 %v2051
    %2543 = vmatpush1.bf16.msra.mxu0 %v2050
    %2544 = vmatprep.subr.bf16.mxu0 %v2055
    %2545 = vmatpush1.bf16.msra.mxu0 %v2054
    %2546 = vmatprep.subr.bf16.mxu0 %v2059
    %2547 = vmatpush1.bf16.msra.mxu0 %v2058
    %2548 = vmatprep.subr.bf16.mxu0 %v2063
    %2549 = vmatpush1.bf16.msra.mxu0 %v2062
    %2550 = vmatprep.subr.bf16.mxu0 %v2067
    %2551 = vmatpush1.bf16.msra.mxu0 %v2066
    %2552 = vmatprep.subr.bf16.mxu0 %v2071
    %2553 = vmatpush1.bf16.msra.mxu0 %v2070
    %2554 = vmatprep.mubr.bf16.mxu0 %v925
    %2555 = vmatmul.mubr.bf16.gmra.mrb[0].mxu0 %v924
    %v2556 = vpop.f32.mrb[0].mxu0
    %v2557 = vadd.f32 %v1225, %v2556
    %v2558 = vpop.f32.mrb[0].mxu0
    %v2559 = vadd.f32 %v1229, %v2558
    %v2560 = vpop.f32.mrb[0].mxu0
    %v2561 = vadd.f32 %v1225, %v2560
    %v2562 = vpop.f32.mrb[0].mxu0
    %v2563 = vadd.f32 %v1229, %v2562
    %2564 = vmatprep.mubr.bf16.mxu0 %v933
    %2565 = vmatmul.mubr.bf16.gmra.mrb[0].mxu0 %v932
    %v2566 = vpop.f32.mrb[0].mxu0
    %v2567 = vadd.f32 %v1225, %v2566
    %v2568 = vpop.f32.mrb[0].mxu0
    %v2569 = vadd.f32 %v1229, %v2568
    %v2570 = vpop.f32.mrb[0].mxu0
    %v2571 = vadd.f32 %v1225, %v2570
    %v2572 = vpop.f32.mrb[0].mxu0
    %v2573 = vadd.f32 %v1229, %v2572
    %2574 = vmatprep.mubr.bf16.mxu0 %v941
    %2575 = vmatmul.mubr.bf16.gmra.mrb[0].mxu0 %v940
    %v2576 = vpop.f32.mrb[0].mxu0
    %v2577 = vadd.f32 %v1225, %v2576
    %v2578 = vpop.f32.mrb[0].mxu0
    %v2579 = vadd.f32 %v1229, %v2578
    %v2580 = vpop.f32.mrb[0].mxu0
    %v2581 = vadd.f32 %v1225, %v2580
    %v2582 = vpop.f32.mrb[0].mxu0
    %v2583 = vadd.f32 %v1229, %v2582
    %2584 = vmatprep.mubr.bf16.mxu0 %v949
    %2585 = vmatmul.mubr.bf16.gmra.mrb[0].mxu0 %v948
    %v2586 = vpop.f32.mrb[0].mxu0
    %v2587 = vadd.f32 %v1225, %v2586
    %v2588 = vpop.f32.mrb[0].mxu0
    %v2589 = vadd.f32 %v1229, %v2588
    %v2590 = vpop.f32.mrb[0].mxu0
    %v2591 = vadd.f32 %v1225, %v2590
    %v2592 = vpop.f32.mrb[0].mxu0
    %v2593 = vadd.f32 %v1229, %v2592
    %2594 = vmatprep.mubr.bf16.mxu0 %v957
    %2595 = vmatmul.mubr.bf16.gmra.mrb[0].mxu0 %v956
    %v2596 = vpop.f32.mrb[0].mxu0
    %v2597 = vadd.f32 %v1225, %v2596
    %v2598 = vpop.f32.mrb[0].mxu0
    %v2599 = vadd.f32 %v1229, %v2598
    %v2600 = vpop.f32.mrb[0].mxu0
    %v2601 = vadd.f32 %v1225, %v2600
    %v2602 = vpop.f32.mrb[0].mxu0
    %v2603 = vadd.f32 %v1229, %v2602
    %2604 = vdwg.mxu0
    %2605 = vmatprep.subr.bf16.mxu0 %v2075
    %2606 = vmatpush1.bf16.msra.mxu0 %v2074
    %2607 = vmatprep.subr.bf16.mxu0 %v2079
    %2608 = vmatpush1.bf16.msra.mxu0 %v2078
    %2609 = vmatprep.subr.bf16.mxu0 %v2083
    %2610 = vmatpush1.bf16.msra.mxu0 %v2082
    %2611 = vmatprep.subr.bf16.mxu0 %v2087
    %2612 = vmatpush1.bf16.msra.mxu0 %v2086
    %2613 = vmatprep.subr.bf16.mxu0 %v2091
    %2614 = vmatpush1.bf16.msra.mxu0 %v2090
    %2615 = vmatprep.subr.bf16.mxu0 %v2095
    %2616 = vmatpush1.bf16.msra.mxu0 %v2094
    %2617 = vmatprep.subr.bf16.mxu0 %v2099
    %2618 = vmatpush1.bf16.msra.mxu0 %v2098
    %2619 = vmatprep.subr.bf16.mxu0 %v2103
    %2620 = vmatpush1.bf16.msra.mxu0 %v2102
    %2621 = vmatprep.subr.bf16.mxu0 %v2107
    %2622 = vmatpush1.bf16.msra.mxu0 %v2106
    %2623 = vmatprep.subr.bf16.mxu0 %v2111
    %2624 = vmatpush1.bf16.msra.mxu0 %v2110
    %2625 = vmatprep.subr.bf16.mxu0 %v2115
    %2626 = vmatpush1.bf16.msra.mxu0 %v2114
    %2627 = vmatprep.subr.bf16.mxu0 %v2119
    %2628 = vmatpush1.bf16.msra.mxu0 %v2118
    %2629 = vmatprep.subr.bf16.mxu0 %v2123
    %2630 = vmatpush1.bf16.msra.mxu0 %v2122
    %2631 = vmatprep.subr.bf16.mxu0 %v2127
    %2632 = vmatpush1.bf16.msra.mxu0 %v2126
    %2633 = vmatprep.subr.bf16.mxu0 %v2131
    %2634 = vmatpush1.bf16.msra.mxu0 %v2130
    %2635 = vmatprep.subr.bf16.mxu0 %v2135
    %2636 = vmatpush1.bf16.msra.mxu0 %v2134
    %2637 = vmatprep.mubr.bf16.mxu0 %v927
    %2638 = vmatmul.mubr.bf16.gmra.mrb[0].mxu0 %v926
    %v2639 = vpop.f32.mrb[0].mxu0
    %v2640 = vadd.f32 %v2557, %v2639
    %v2641 = vpop.f32.mrb[0].mxu0
    %v2642 = vadd.f32 %v2559, %v2641
    %v2643 = vpop.f32.mrb[0].mxu0
    %v2644 = vadd.f32 %v2561, %v2643
    %v2645 = vpop.f32.mrb[0].mxu0
    %v2646 = vadd.f32 %v2563, %v2645
    %2647 = vmatprep.mubr.bf16.mxu0 %v935
    %2648 = vmatmul.mubr.bf16.gmra.mrb[0].mxu0 %v934
    %v2649 = vpop.f32.mrb[0].mxu0
    %v2650 = vadd.f32 %v2567, %v2649
    %v2651 = vpop.f32.mrb[0].mxu0
    %v2652 = vadd.f32 %v2569, %v2651
    %v2653 = vpop.f32.mrb[0].mxu0
    %v2654 = vadd.f32 %v2571, %v2653
    %v2655 = vpop.f32.mrb[0].mxu0
    %v2656 = vadd.f32 %v2573, %v2655
    %2657 = vmatprep.mubr.bf16.mxu0 %v943
    %2658 = vmatmul.mubr.bf16.gmra.mrb[0].mxu0 %v942
    %v2659 = vpop.f32.mrb[0].mxu0
    %v2660 = vadd.f32 %v2577, %v2659
    %v2661 = vpop.f32.mrb[0].mxu0
    %v2662 = vadd.f32 %v2579, %v2661
    %v2663 = vpop.f32.mrb[0].mxu0
    %v2664 = vadd.f32 %v2581, %v2663
    %v2665 = vpop.f32.mrb[0].mxu0
    %v2666 = vadd.f32 %v2583, %v2665
    %2667 = vmatprep.mubr.bf16.mxu0 %v951
    %2668 = vmatmul.mubr.bf16.gmra.mrb[0].mxu0 %v950
    %v2669 = vpop.f32.mrb[0].mxu0
    %v2670 = vadd.f32 %v2587, %v2669
    %v2671 = vpop.f32.mrb[0].mxu0
    %v2672 = vadd.f32 %v2589, %v2671
    %v2673 = vpop.f32.mrb[0].mxu0
    %v2674 = vadd.f32 %v2591, %v2673
    %v2675 = vpop.f32.mrb[0].mxu0
    %v2676 = vadd.f32 %v2593, %v2675
    %2677 = vmatprep.mubr.bf16.mxu0 %v959
    %2678 = vmatmul.mubr.bf16.gmra.mrb[0].mxu0 %v958
    %v2679 = vpop.f32.mrb[0].mxu0
    %v2680 = vadd.f32 %v2597, %v2679
    %v2681 = vpop.f32.mrb[0].mxu0
    %v2682 = vadd.f32 %v2599, %v2681
    %v2683 = vpop.f32.mrb[0].mxu0
    %v2684 = vadd.f32 %v2601, %v2683
    %v2685 = vpop.f32.mrb[0].mxu0
    %v2686 = vadd.f32 %v2603, %v2685
    %2687 = vdwg.mxu0
    %2688 = vmatprep.subr.bf16.mxu0 %v2139
    %2689 = vmatpush1.bf16.msra.mxu0 %v2138
    %2690 = vmatprep.subr.bf16.mxu0 %v2143
    %2691 = vmatpush1.bf16.msra.mxu0 %v2142
    %2692 = vmatprep.subr.bf16.mxu0 %v2147
    %2693 = vmatpush1.bf16.msra.mxu0 %v2146
    %2694 = vmatprep.subr.bf16.mxu0 %v2151
    %2695 = vmatpush1.bf16.msra.mxu0 %v2150
    %2696 = vmatprep.subr.bf16.mxu0 %v2155
    %2697 = vmatpush1.bf16.msra.mxu0 %v2154
    %2698 = vmatprep.subr.bf16.mxu0 %v2159
    %2699 = vmatpush1.bf16.msra.mxu0 %v2158
    %2700 = vmatprep.subr.bf16.mxu0 %v2163
    %2701 = vmatpush1.bf16.msra.mxu0 %v2162
    %2702 = vmatprep.subr.bf16.mxu0 %v2167
    %2703 = vmatpush1.bf16.msra.mxu0 %v2166
    %2704 = vmatprep.subr.bf16.mxu0 %v2171
    %2705 = vmatpush1.bf16.msra.mxu0 %v2170
    %2706 = vmatprep.subr.bf16.mxu0 %v2175
    %2707 = vmatpush1.bf16.msra.mxu0 %v2174
    %2708 = vmatprep.subr.bf16.mxu0 %v2179
    %2709 = vmatpush1.bf16.msra.mxu0 %v2178
    %2710 = vmatprep.subr.bf16.mxu0 %v2183
    %2711 = vmatpush1.bf16.msra.mxu0 %v2182
    %2712 = vmatprep.subr.bf16.mxu0 %v2187
    %2713 = vmatpush1.bf16.msra.mxu0 %v2186
    %2714 = vmatprep.subr.bf16.mxu0 %v2191
    %2715 = vmatpush1.bf16.msra.mxu0 %v2190
    %2716 = vmatprep.subr.bf16.mxu0 %v2195
    %2717 = vmatpush1.bf16.msra.mxu0 %v2194
    %2718 = vmatprep.subr.bf16.mxu0 %v2199
    %2719 = vmatpush1.bf16.msra.mxu0 %v2198
    %2720 = vmatprep.mubr.bf16.mxu0 %v929
    %2721 = vmatmul.mubr.bf16.gmra.mrb[0].mxu0 %v928
    %v2722 = vpop.f32.mrb[0].mxu0
    %v2723 = vadd.f32 %v2640, %v2722
    %v2724 = vpop.f32.mrb[0].mxu0
    %v2725 = vadd.f32 %v2642, %v2724
    %v2726 = vpop.f32.mrb[0].mxu0
    %v2727 = vadd.f32 %v2644, %v2726
    %v2728 = vpop.f32.mrb[0].mxu0
    %v2729 = vadd.f32 %v2646, %v2728
    %2730 = vmatprep.mubr.bf16.mxu0 %v937
    %2731 = vmatmul.mubr.bf16.gmra.mrb[0].mxu0 %v936
    %v2732 = vpop.f32.mrb[0].mxu0
    %v2733 = vadd.f32 %v2650, %v2732
    %v2734 = vpop.f32.mrb[0].mxu0
    %v2735 = vadd.f32 %v2652, %v2734
    %v2736 = vpop.f32.mrb[0].mxu0
    %v2737 = vadd.f32 %v2654, %v2736
    %v2738 = vpop.f32.mrb[0].mxu0
    %v2739 = vadd.f32 %v2656, %v2738
    %2740 = vmatprep.mubr.bf16.mxu0 %v945
    %2741 = vmatmul.mubr.bf16.gmra.mrb[0].mxu0 %v944
    %v2742 = vpop.f32.mrb[0].mxu0
    %v2743 = vadd.f32 %v2660, %v2742
    %v2744 = vpop.f32.mrb[0].mxu0
    %v2745 = vadd.f32 %v2662, %v2744
    %v2746 = vpop.f32.mrb[0].mxu0
    %v2747 = vadd.f32 %v2664, %v2746
    %v2748 = vpop.f32.mrb[0].mxu0
    %v2749 = vadd.f32 %v2666, %v2748
    %2750 = vmatprep.mubr.bf16.mxu0 %v953
    %2751 = vmatmul.mubr.bf16.gmra.mrb[0].mxu0 %v952
    %v2752 = vpop.f32.mrb[0].mxu0
    %v2753 = vadd.f32 %v2670, %v2752
    %v2754 = vpop.f32.mrb[0].mxu0
    %v2755 = vadd.f32 %v2672, %v2754
    %v2756 = vpop.f32.mrb[0].mxu0
    %v2757 = vadd.f32 %v2674, %v2756
    %v2758 = vpop.f32.mrb[0].mxu0
    %v2759 = vadd.f32 %v2676, %v2758
    %2760 = vmatprep.mubr.bf16.mxu0 %v961
    %2761 = vmatmul.mubr.bf16.gmra.mrb[0].mxu0 %v960
    %v2762 = vpop.f32.mrb[0].mxu0
    %v2763 = vadd.f32 %v2680, %v2762
    %v2764 = vpop.f32.mrb[0].mxu0
    %v2765 = vadd.f32 %v2682, %v2764
    %v2766 = vpop.f32.mrb[0].mxu0
    %v2767 = vadd.f32 %v2684, %v2766
    %v2768 = vpop.f32.mrb[0].mxu0
    %v2769 = vadd.f32 %v2686, %v2768
    %2770 = vdwg.mxu0
    %2771 = vmatprep.subr.bf16.mxu0 %v2203
    %2772 = vmatpush1.bf16.msra.mxu0 %v2202
    %2773 = vmatprep.subr.bf16.mxu0 %v2207
    %2774 = vmatpush1.bf16.msra.mxu0 %v2206
    %2775 = vmatprep.subr.bf16.mxu0 %v2211
    %2776 = vmatpush1.bf16.msra.mxu0 %v2210
    %2777 = vmatprep.subr.bf16.mxu0 %v2215
    %2778 = vmatpush1.bf16.msra.mxu0 %v2214
    %2779 = vmatprep.subr.bf16.mxu0 %v2219
    %2780 = vmatpush1.bf16.msra.mxu0 %v2218
    %2781 = vmatprep.subr.bf16.mxu0 %v2223
    %2782 = vmatpush1.bf16.msra.mxu0 %v2222
    %2783 = vmatprep.subr.bf16.mxu0 %v2227
    %2784 = vmatpush1.bf16.msra.mxu0 %v2226
    %2785 = vmatprep.subr.bf16.mxu0 %v2231
    %2786 = vmatpush1.bf16.msra.mxu0 %v2230
    %2787 = vmatprep.subr.bf16.mxu0 %v2235
    %2788 = vmatpush1.bf16.msra.mxu0 %v2234
    %2789 = vmatprep.subr.bf16.mxu0 %v2239
    %2790 = vmatpush1.bf16.msra.mxu0 %v2238
    %2791 = vmatprep.subr.bf16.mxu0 %v2243
    %2792 = vmatpush1.bf16.msra.mxu0 %v2242
    %2793 = vmatprep.subr.bf16.mxu0 %v2247
    %2794 = vmatpush1.bf16.msra.mxu0 %v2246
    %2795 = vmatprep.subr.bf16.mxu0 %v2251
    %2796 = vmatpush1.bf16.msra.mxu0 %v2250
    %2797 = vmatprep.subr.bf16.mxu0 %v2255
    %2798 = vmatpush1.bf16.msra.mxu0 %v2254
    %2799 = vmatprep.subr.bf16.mxu0 %v2259
    %2800 = vmatpush1.bf16.msra.mxu0 %v2258
    %2801 = vmatprep.subr.bf16.mxu0 %v2263
    %2802 = vmatpush1.bf16.msra.mxu0 %v2262
    %2803 = vmatprep.mubr.bf16.mxu0 %v931
    %2804 = vmatmul.mubr.bf16.gmra.mrb[0].mxu0 %v930
    %v2805 = vpop.f32.mrb[0].mxu0
    %v2806 = vadd.f32 %v2723, %v2805
    %v2807 = vpop.f32.mrb[0].mxu0
    %v2808 = vadd.f32 %v2725, %v2807
    %v2809 = vpop.f32.mrb[0].mxu0
    %v2810 = vadd.f32 %v2727, %v2809
    %v2811 = vpop.f32.mrb[0].mxu0
    %v2812 = vadd.f32 %v2729, %v2811
    %2813 = vmatprep.mubr.bf16.mxu0 %v939
    %2814 = vmatmul.mubr.bf16.gmra.mrb[0].mxu0 %v938
    %v2815 = vpop.f32.mrb[0].mxu0
    %v2816 = vadd.f32 %v2733, %v2815
    %v2817 = vpop.f32.mrb[0].mxu0
    %v2818 = vadd.f32 %v2735, %v2817
    %v2819 = vpop.f32.mrb[0].mxu0
    %v2820 = vadd.f32 %v2737, %v2819
    %v2821 = vpop.f32.mrb[0].mxu0
    %v2822 = vadd.f32 %v2739, %v2821
    %2823 = vmatprep.mubr.bf16.mxu0 %v947
    %2824 = vmatmul.mubr.bf16.gmra.mrb[0].mxu0 %v946
    %v2825 = vpop.f32.mrb[0].mxu0
    %v2826 = vadd.f32 %v2743, %v2825
    %v2827 = vpop.f32.mrb[0].mxu0
    %v2828 = vadd.f32 %v2745, %v2827
    %v2829 = vpop.f32.mrb[0].mxu0
    %v2830 = vadd.f32 %v2747, %v2829
    %v2831 = vpop.f32.mrb[0].mxu0
    %v2832 = vadd.f32 %v2749, %v2831
    %2833 = vmatprep.mubr.bf16.mxu0 %v955
    %2834 = vmatmul.mubr.bf16.gmra.mrb[0].mxu0 %v954
    %v2835 = vpop.f32.mrb[0].mxu0
    %v2836 = vadd.f32 %v2753, %v2835
    %v2837 = vpop.f32.mrb[0].mxu0
    %v2838 = vadd.f32 %v2755, %v2837
    %v2839 = vpop.f32.mrb[0].mxu0
    %v2840 = vadd.f32 %v2757, %v2839
    %v2841 = vpop.f32.mrb[0].mxu0
    %v2842 = vadd.f32 %v2759, %v2841
    %2843 = vmatprep.mubr.bf16.mxu0 %v963
    %2844 = vmatmul.mubr.bf16.gmra.mrb[0].mxu0 %v962
    %v2845 = vpop.f32.mrb[0].mxu0
    %v2846 = vadd.f32 %v2763, %v2845
    %v2847 = vpop.f32.mrb[0].mxu0
    %v2848 = vadd.f32 %v2765, %v2847
    %v2849 = vpop.f32.mrb[0].mxu0
    %v2850 = vadd.f32 %v2767, %v2849
    %v2851 = vpop.f32.mrb[0].mxu0
    %v2852 = vadd.f32 %v2769, %v2851
    %2853 = vdwg.mxu0
    %2854 = vmatprep.subr.bf16.mxu0 %v2013
    %2855 = vmatpush1.bf16.msra.mxu0 %v2012
    %2856 = vmatprep.subr.bf16.mxu0 %v2017
    %2857 = vmatpush1.bf16.msra.mxu0 %v2016
    %2858 = vmatprep.subr.bf16.mxu0 %v2021
    %2859 = vmatpush1.bf16.msra.mxu0 %v2020
    %2860 = vmatprep.subr.bf16.mxu0 %v2025
    %2861 = vmatpush1.bf16.msra.mxu0 %v2024
    %2862 = vmatprep.subr.bf16.mxu0 %v2029
    %2863 = vmatpush1.bf16.msra.mxu0 %v2028
    %2864 = vmatprep.subr.bf16.mxu0 %v2033
    %2865 = vmatpush1.bf16.msra.mxu0 %v2032
    %2866 = vmatprep.subr.bf16.mxu0 %v2037
    %2867 = vmatpush1.bf16.msra.mxu0 %v2036
    %2868 = vmatprep.subr.bf16.mxu0 %v2041
    %2869 = vmatpush1.bf16.msra.mxu0 %v2040
    %2870 = vmatprep.subr.bf16.mxu0 %v2045
    %2871 = vmatpush1.bf16.msra.mxu0 %v2044
    %2872 = vmatprep.subr.bf16.mxu0 %v2049
    %2873 = vmatpush1.bf16.msra.mxu0 %v2048
    %2874 = vmatprep.subr.bf16.mxu0 %v2053
    %2875 = vmatpush1.bf16.msra.mxu0 %v2052
    %2876 = vmatprep.subr.bf16.mxu0 %v2057
    %2877 = vmatpush1.bf16.msra.mxu0 %v2056
    %2878 = vmatprep.subr.bf16.mxu0 %v2061
    %2879 = vmatpush1.bf16.msra.mxu0 %v2060
    %2880 = vmatprep.subr.bf16.mxu0 %v2065
    %2881 = vmatpush1.bf16.msra.mxu0 %v2064
    %2882 = vmatprep.subr.bf16.mxu0 %v2069
    %2883 = vmatpush1.bf16.msra.mxu0 %v2068
    %2884 = vmatprep.subr.bf16.mxu0 %v2073
    %2885 = vmatpush1.bf16.msra.mxu0 %v2072
    %2886 = vmatprep.mubr.bf16.mxu0 %v925
    %2887 = vmatmul.mubr.bf16.gmra.mrb[0].mxu0 %v924
    %v2888 = vpop.f32.mrb[0].mxu0
    %v2889 = vadd.f32 %v1233, %v2888
    %v2890 = vpop.f32.mrb[0].mxu0
    %v2891 = vadd.f32 %v1237, %v2890
    %v2892 = vpop.f32.mrb[0].mxu0
    %v2893 = vadd.f32 %v1233, %v2892
    %v2894 = vpop.f32.mrb[0].mxu0
    %v2895 = vadd.f32 %v1237, %v2894
    %2896 = vmatprep.mubr.bf16.mxu0 %v933
    %2897 = vmatmul.mubr.bf16.gmra.mrb[0].mxu0 %v932
    %v2898 = vpop.f32.mrb[0].mxu0
    %v2899 = vadd.f32 %v1233, %v2898
    %v2900 = vpop.f32.mrb[0].mxu0
    %v2901 = vadd.f32 %v1237, %v2900
    %v2902 = vpop.f32.mrb[0].mxu0
    %v2903 = vadd.f32 %v1233, %v2902
    %v2904 = vpop.f32.mrb[0].mxu0
    %v2905 = vadd.f32 %v1237, %v2904
    %2906 = vmatprep.mubr.bf16.mxu0 %v941
    %2907 = vmatmul.mubr.bf16.gmra.mrb[0].mxu0 %v940
    %v2908 = vpop.f32.mrb[0].mxu0
    %v2909 = vadd.f32 %v1233, %v2908
    %v2910 = vpop.f32.mrb[0].mxu0
    %v2911 = vadd.f32 %v1237, %v2910
    %v2912 = vpop.f32.mrb[0].mxu0
    %v2913 = vadd.f32 %v1233, %v2912
    %v2914 = vpop.f32.mrb[0].mxu0
    %v2915 = vadd.f32 %v1237, %v2914
    %2916 = vmatprep.mubr.bf16.mxu0 %v949
    %2917 = vmatmul.mubr.bf16.gmra.mrb[0].mxu0 %v948
    %v2918 = vpop.f32.mrb[0].mxu0
    %v2919 = vadd.f32 %v1233, %v2918
    %v2920 = vpop.f32.mrb[0].mxu0
    %v2921 = vadd.f32 %v1237, %v2920
    %v2922 = vpop.f32.mrb[0].mxu0
    %v2923 = vadd.f32 %v1233, %v2922
    %v2924 = vpop.f32.mrb[0].mxu0
    %v2925 = vadd.f32 %v1237, %v2924
    %2926 = vmatprep.mubr.bf16.mxu0 %v957
    %2927 = vmatmul.mubr.bf16.gmra.mrb[0].mxu0 %v956
    %v2928 = vpop.f32.mrb[0].mxu0
    %v2929 = vadd.f32 %v1233, %v2928
    %v2930 = vpop.f32.mrb[0].mxu0
    %v2931 = vadd.f32 %v1237, %v2930
    %v2932 = vpop.f32.mrb[0].mxu0
    %v2933 = vadd.f32 %v1233, %v2932
    %v2934 = vpop.f32.mrb[0].mxu0
    %v2935 = vadd.f32 %v1237, %v2934
    %2936 = vdwg.mxu0
    %2937 = vmatprep.subr.bf16.mxu0 %v2077
    %2938 = vmatpush1.bf16.msra.mxu0 %v2076
    %2939 = vmatprep.subr.bf16.mxu0 %v2081
    %2940 = vmatpush1.bf16.msra.mxu0 %v2080
    %2941 = vmatprep.subr.bf16.mxu0 %v2085
    %2942 = vmatpush1.bf16.msra.mxu0 %v2084
    %2943 = vmatprep.subr.bf16.mxu0 %v2089
    %2944 = vmatpush1.bf16.msra.mxu0 %v2088
    %2945 = vmatprep.subr.bf16.mxu0 %v2093
    %2946 = vmatpush1.bf16.msra.mxu0 %v2092
    %2947 = vmatprep.subr.bf16.mxu0 %v2097
    %2948 = vmatpush1.bf16.msra.mxu0 %v2096
    %2949 = vmatprep.subr.bf16.mxu0 %v2101
    %2950 = vmatpush1.bf16.msra.mxu0 %v2100
    %2951 = vmatprep.subr.bf16.mxu0 %v2105
    %2952 = vmatpush1.bf16.msra.mxu0 %v2104
    %2953 = vmatprep.subr.bf16.mxu0 %v2109
    %2954 = vmatpush1.bf16.msra.mxu0 %v2108
    %2955 = vmatprep.subr.bf16.mxu0 %v2113
    %2956 = vmatpush1.bf16.msra.mxu0 %v2112
    %2957 = vmatprep.subr.bf16.mxu0 %v2117
    %2958 = vmatpush1.bf16.msra.mxu0 %v2116
    %2959 = vmatprep.subr.bf16.mxu0 %v2121
    %2960 = vmatpush1.bf16.msra.mxu0 %v2120
    %2961 = vmatprep.subr.bf16.mxu0 %v2125
    %2962 = vmatpush1.bf16.msra.mxu0 %v2124
    %2963 = vmatprep.subr.bf16.mxu0 %v2129
    %2964 = vmatpush1.bf16.msra.mxu0 %v2128
    %2965 = vmatprep.subr.bf16.mxu0 %v2133
    %2966 = vmatpush1.bf16.msra.mxu0 %v2132
    %2967 = vmatprep.subr.bf16.mxu0 %v2137
    %2968 = vmatpush1.bf16.msra.mxu0 %v2136
    %2969 = vmatprep.mubr.bf16.mxu0 %v927
    %2970 = vmatmul.mubr.bf16.gmra.mrb[0].mxu0 %v926
    %v2971 = vpop.f32.mrb[0].mxu0
    %v2972 = vadd.f32 %v2889, %v2971
    %v2973 = vpop.f32.mrb[0].mxu0
    %v2974 = vadd.f32 %v2891, %v2973
    %v2975 = vpop.f32.mrb[0].mxu0
    %v2976 = vadd.f32 %v2893, %v2975
    %v2977 = vpop.f32.mrb[0].mxu0
    %v2978 = vadd.f32 %v2895, %v2977
    %2979 = vmatprep.mubr.bf16.mxu0 %v935
    %2980 = vmatmul.mubr.bf16.gmra.mrb[0].mxu0 %v934
    %v2981 = vpop.f32.mrb[0].mxu0
    %v2982 = vadd.f32 %v2899, %v2981
    %v2983 = vpop.f32.mrb[0].mxu0
    %v2984 = vadd.f32 %v2901, %v2983
    %v2985 = vpop.f32.mrb[0].mxu0
    %v2986 = vadd.f32 %v2903, %v2985
    %v2987 = vpop.f32.mrb[0].mxu0
    %v2988 = vadd.f32 %v2905, %v2987
    %2989 = vmatprep.mubr.bf16.mxu0 %v943
    %2990 = vmatmul.mubr.bf16.gmra.mrb[0].mxu0 %v942
    %v2991 = vpop.f32.mrb[0].mxu0
    %v2992 = vadd.f32 %v2909, %v2991
    %v2993 = vpop.f32.mrb[0].mxu0
    %v2994 = vadd.f32 %v2911, %v2993
    %v2995 = vpop.f32.mrb[0].mxu0
    %v2996 = vadd.f32 %v2913, %v2995
    %v2997 = vpop.f32.mrb[0].mxu0
    %v2998 = vadd.f32 %v2915, %v2997
    %2999 = vmatprep.mubr.bf16.mxu0 %v951
    %3000 = vmatmul.mubr.bf16.gmra.mrb[0].mxu0 %v950
    %v3001 = vpop.f32.mrb[0].mxu0
    %v3002 = vadd.f32 %v2919, %v3001
    %v3003 = vpop.f32.mrb[0].mxu0
    %v3004 = vadd.f32 %v2921, %v3003
    %v3005 = vpop.f32.mrb[0].mxu0
    %v3006 = vadd.f32 %v2923, %v3005
    %v3007 = vpop.f32.mrb[0].mxu0
    %v3008 = vadd.f32 %v2925, %v3007
    %3009 = vmatprep.mubr.bf16.mxu0 %v959
    %3010 = vmatmul.mubr.bf16.gmra.mrb[0].mxu0 %v958
    %v3011 = vpop.f32.mrb[0].mxu0
    %v3012 = vadd.f32 %v2929, %v3011
    %v3013 = vpop.f32.mrb[0].mxu0
    %v3014 = vadd.f32 %v2931, %v3013
    %v3015 = vpop.f32.mrb[0].mxu0
    %v3016 = vadd.f32 %v2933, %v3015
    %v3017 = vpop.f32.mrb[0].mxu0
    %v3018 = vadd.f32 %v2935, %v3017
    %3019 = vdwg.mxu0
    %3020 = vmatprep.subr.bf16.mxu0 %v2141
    %3021 = vmatpush1.bf16.msra.mxu0 %v2140
    %3022 = vmatprep.subr.bf16.mxu0 %v2145
    %3023 = vmatpush1.bf16.msra.mxu0 %v2144
    %3024 = vmatprep.subr.bf16.mxu0 %v2149
    %3025 = vmatpush1.bf16.msra.mxu0 %v2148
    %3026 = vmatprep.subr.bf16.mxu0 %v2153
    %3027 = vmatpush1.bf16.msra.mxu0 %v2152
    %3028 = vmatprep.subr.bf16.mxu0 %v2157
    %3029 = vmatpush1.bf16.msra.mxu0 %v2156
    %3030 = vmatprep.subr.bf16.mxu0 %v2161
    %3031 = vmatpush1.bf16.msra.mxu0 %v2160
    %3032 = vmatprep.subr.bf16.mxu0 %v2165
    %3033 = vmatpush1.bf16.msra.mxu0 %v2164
    %3034 = vmatprep.subr.bf16.mxu0 %v2169
    %3035 = vmatpush1.bf16.msra.mxu0 %v2168
    %3036 = vmatprep.subr.bf16.mxu0 %v2173
    %3037 = vmatpush1.bf16.msra.mxu0 %v2172
    %3038 = vmatprep.subr.bf16.mxu0 %v2177
    %3039 = vmatpush1.bf16.msra.mxu0 %v2176
    %3040 = vmatprep.subr.bf16.mxu0 %v2181
    %3041 = vmatpush1.bf16.msra.mxu0 %v2180
    %3042 = vmatprep.subr.bf16.mxu0 %v2185
    %3043 = vmatpush1.bf16.msra.mxu0 %v2184
    %3044 = vmatprep.subr.bf16.mxu0 %v2189
    %3045 = vmatpush1.bf16.msra.mxu0 %v2188
    %3046 = vmatprep.subr.bf16.mxu0 %v2193
    %3047 = vmatpush1.bf16.msra.mxu0 %v2192
    %3048 = vmatprep.subr.bf16.mxu0 %v2197
    %3049 = vmatpush1.bf16.msra.mxu0 %v2196
    %3050 = vmatprep.subr.bf16.mxu0 %v2201
    %3051 = vmatpush1.bf16.msra.mxu0 %v2200
    %3052 = vmatprep.mubr.bf16.mxu0 %v929
    %3053 = vmatmul.mubr.bf16.gmra.mrb[0].mxu0 %v928
    %v3054 = vpop.f32.mrb[0].mxu0
    %v3055 = vadd.f32 %v2972, %v3054
    %v3056 = vpop.f32.mrb[0].mxu0
    %v3057 = vadd.f32 %v2974, %v3056
    %v3058 = vpop.f32.mrb[0].mxu0
    %v3059 = vadd.f32 %v2976, %v3058
    %v3060 = vpop.f32.mrb[0].mxu0
    %v3061 = vadd.f32 %v2978, %v3060
    %3062 = vmatprep.mubr.bf16.mxu0 %v937
    %3063 = vmatmul.mubr.bf16.gmra.mrb[0].mxu0 %v936
    %v3064 = vpop.f32.mrb[0].mxu0
    %v3065 = vadd.f32 %v2982, %v3064
    %v3066 = vpop.f32.mrb[0].mxu0
    %v3067 = vadd.f32 %v2984, %v3066
    %v3068 = vpop.f32.mrb[0].mxu0
    %v3069 = vadd.f32 %v2986, %v3068
    %v3070 = vpop.f32.mrb[0].mxu0
    %v3071 = vadd.f32 %v2988, %v3070
    %3072 = vmatprep.mubr.bf16.mxu0 %v945
    %3073 = vmatmul.mubr.bf16.gmra.mrb[0].mxu0 %v944
    %v3074 = vpop.f32.mrb[0].mxu0
    %v3075 = vadd.f32 %v2992, %v3074
    %v3076 = vpop.f32.mrb[0].mxu0
    %v3077 = vadd.f32 %v2994, %v3076
    %v3078 = vpop.f32.mrb[0].mxu0
    %v3079 = vadd.f32 %v2996, %v3078
    %v3080 = vpop.f32.mrb[0].mxu0
    %v3081 = vadd.f32 %v2998, %v3080
    %3082 = vmatprep.mubr.bf16.mxu0 %v953
    %3083 = vmatmul.mubr.bf16.gmra.mrb[0].mxu0 %v952
    %v3084 = vpop.f32.mrb[0].mxu0
    %v3085 = vadd.f32 %v3002, %v3084
    %v3086 = vpop.f32.mrb[0].mxu0
    %v3087 = vadd.f32 %v3004, %v3086
    %v3088 = vpop.f32.mrb[0].mxu0
    %v3089 = vadd.f32 %v3006, %v3088
    %v3090 = vpop.f32.mrb[0].mxu0
    %v3091 = vadd.f32 %v3008, %v3090
    %3092 = vmatprep.mubr.bf16.mxu0 %v961
    %3093 = vmatmul.mubr.bf16.gmra.mrb[0].mxu0 %v960
    %v3094 = vpop.f32.mrb[0].mxu0
    %v3095 = vadd.f32 %v3012, %v3094
    %v3096 = vpop.f32.mrb[0].mxu0
    %v3097 = vadd.f32 %v3014, %v3096
    %v3098 = vpop.f32.mrb[0].mxu0
    %v3099 = vadd.f32 %v3016, %v3098
    %v3100 = vpop.f32.mrb[0].mxu0
    %v3101 = vadd.f32 %v3018, %v3100
    %3102 = vdwg.mxu0
    %3103 = vmatprep.subr.bf16.mxu0 %v2205
    %3104 = vmatpush1.bf16.msra.mxu0 %v2204
    %3105 = vmatprep.subr.bf16.mxu0 %v2209
    %3106 = vmatpush1.bf16.msra.mxu0 %v2208
    %3107 = vmatprep.subr.bf16.mxu0 %v2213
    %3108 = vmatpush1.bf16.msra.mxu0 %v2212
    %3109 = vmatprep.subr.bf16.mxu0 %v2217
    %3110 = vmatpush1.bf16.msra.mxu0 %v2216
    %3111 = vmatprep.subr.bf16.mxu0 %v2221
    %3112 = vmatpush1.bf16.msra.mxu0 %v2220
    %3113 = vmatprep.subr.bf16.mxu0 %v2225
    %3114 = vmatpush1.bf16.msra.mxu0 %v2224
    %3115 = vmatprep.subr.bf16.mxu0 %v2229
    %3116 = vmatpush1.bf16.msra.mxu0 %v2228
    %3117 = vmatprep.subr.bf16.mxu0 %v2233
    %3118 = vmatpush1.bf16.msra.mxu0 %v2232
    %3119 = vmatprep.subr.bf16.mxu0 %v2237
    %3120 = vmatpush1.bf16.msra.mxu0 %v2236
    %3121 = vmatprep.subr.bf16.mxu0 %v2241
    %3122 = vmatpush1.bf16.msra.mxu0 %v2240
    %3123 = vmatprep.subr.bf16.mxu0 %v2245
    %3124 = vmatpush1.bf16.msra.mxu0 %v2244
    %3125 = vmatprep.subr.bf16.mxu0 %v2249
    %3126 = vmatpush1.bf16.msra.mxu0 %v2248
    %3127 = vmatprep.subr.bf16.mxu0 %v2253
    %3128 = vmatpush1.bf16.msra.mxu0 %v2252
    %3129 = vmatprep.subr.bf16.mxu0 %v2257
    %3130 = vmatpush1.bf16.msra.mxu0 %v2256
    %3131 = vmatprep.subr.bf16.mxu0 %v2261
    %3132 = vmatpush1.bf16.msra.mxu0 %v2260
    %3133 = vmatprep.subr.bf16.mxu0 %v2265
    %3134 = vmatpush1.bf16.msra.mxu0 %v2264
    %3135 = vmatprep.mubr.bf16.mxu0 %v931
    %3136 = vmatmul.mubr.bf16.gmra.mrb[0].mxu0 %v930
    %v3137 = vpop.f32.mrb[0].mxu0
    %v3138 = vadd.f32 %v3055, %v3137
    %v3139 = vpop.f32.mrb[0].mxu0
    %v3140 = vadd.f32 %v3057, %v3139
    %v3141 = vpop.f32.mrb[0].mxu0
    %v3142 = vadd.f32 %v3059, %v3141
    %v3143 = vpop.f32.mrb[0].mxu0
    %v3144 = vadd.f32 %v3061, %v3143
    %3145 = vmatprep.mubr.bf16.mxu0 %v939
    %3146 = vmatmul.mubr.bf16.gmra.mrb[0].mxu0 %v938
    %v3147 = vpop.f32.mrb[0].mxu0
    %v3148 = vadd.f32 %v3065, %v3147
    %v3149 = vpop.f32.mrb[0].mxu0
    %v3150 = vadd.f32 %v3067, %v3149
    %v3151 = vpop.f32.mrb[0].mxu0
    %v3152 = vadd.f32 %v3069, %v3151
    %v3153 = vpop.f32.mrb[0].mxu0
    %v3154 = vadd.f32 %v3071, %v3153
    %3155 = vmatprep.mubr.bf16.mxu0 %v947
    %3156 = vmatmul.mubr.bf16.gmra.mrb[0].mxu0 %v946
    %v3157 = vpop.f32.mrb[0].mxu0
    %v3158 = vadd.f32 %v3075, %v3157
    %v3159 = vpop.f32.mrb[0].mxu0
    %v3160 = vadd.f32 %v3077, %v3159
    %v3161 = vpop.f32.mrb[0].mxu0
    %v3162 = vadd.f32 %v3079, %v3161
    %v3163 = vpop.f32.mrb[0].mxu0
    %v3164 = vadd.f32 %v3081, %v3163
    %3165 = vmatprep.mubr.bf16.mxu0 %v955
    %3166 = vmatmul.mubr.bf16.gmra.mrb[0].mxu0 %v954
    %v3167 = vpop.f32.mrb[0].mxu0
    %v3168 = vadd.f32 %v3085, %v3167
    %v3169 = vpop.f32.mrb[0].mxu0
    %v3170 = vadd.f32 %v3087, %v3169
    %v3171 = vpop.f32.mrb[0].mxu0
    %v3172 = vadd.f32 %v3089, %v3171
    %v3173 = vpop.f32.mrb[0].mxu0
    %v3174 = vadd.f32 %v3091, %v3173
    %3175 = vmatprep.mubr.bf16.mxu0 %v963
    %3176 = vmatmul.mubr.bf16.gmra.mrb[0].mxu0 %v962
    %v3177 = vpop.f32.mrb[0].mxu0
    %v3178 = vadd.f32 %v3095, %v3177
    %v3179 = vpop.f32.mrb[0].mxu0
    %v3180 = vadd.f32 %v3097, %v3179
    %v3181 = vpop.f32.mrb[0].mxu0
    %v3182 = vadd.f32 %v3099, %v3181
    %v3183 = vpop.f32.mrb[0].mxu0
    %v3184 = vadd.f32 %v3101, %v3183
    %3185 = vdwg.mxu0
    %v3186 = vmax.f32 %v2806, 0.0
    %v3187 = vmax.f32 %v2808, 0.0
    %v3188 = vmax.f32 %v3138, 0.0
    %v3189 = vmax.f32 %v3140, 0.0
    %v3190 = vmax.f32 %v2810, 0.0
    %v3191 = vmax.f32 %v2812, 0.0
    %v3192 = vmax.f32 %v3142, 0.0
    %v3193 = vmax.f32 %v3144, 0.0
    %v3194 = vmax.f32 %v2816, 0.0
    %v3195 = vmax.f32 %v2818, 0.0
    %v3196 = vmax.f32 %v3148, 0.0
    %v3197 = vmax.f32 %v3150, 0.0
    %v3198 = vmax.f32 %v2820, 0.0
    %v3199 = vmax.f32 %v2822, 0.0
    %v3200 = vmax.f32 %v3152, 0.0
    %v3201 = vmax.f32 %v3154, 0.0
    %v3202 = vmax.f32 %v2826, 0.0
    %v3203 = vmax.f32 %v2828, 0.0
    %v3204 = vmax.f32 %v3158, 0.0
    %v3205 = vmax.f32 %v3160, 0.0
    %v3206 = vmax.f32 %v2830, 0.0
    %v3207 = vmax.f32 %v2832, 0.0
    %v3208 = vmax.f32 %v3162, 0.0
    %v3209 = vmax.f32 %v3164, 0.0
    %v3210 = vmax.f32 %v2836, 0.0
    %v3211 = vmax.f32 %v2838, 0.0
    %v3212 = vmax.f32 %v3168, 0.0
    %v3213 = vmax.f32 %v3170, 0.0
    %v3214 = vmax.f32 %v2840, 0.0
    %v3215 = vmax.f32 %v2842, 0.0
    %v3216 = vmax.f32 %v3172, 0.0
    %v3217 = vmax.f32 %v3174, 0.0
    %v3218 = vmax.f32 %v2846, 0.0
    %v3219 = vmax.f32 %v2848, 0.0
    %v3220 = vmax.f32 %v3178, 0.0
    %v3221 = vmax.f32 %v3180, 0.0
    %v3222 = vmax.f32 %v2850, 0.0
    %v3223 = vmax.f32 %v2852, 0.0
    %v3224 = vmax.f32 %v3182, 0.0
    %v3225 = vmax.f32 %v3184, 0.0
    %v3226 = vld [vmem:[%s5] sm:$0xf]
    %v3228 = vlaneseq
    %v3229 = vshrl.u32 %v3228, 7
    %v3230 = vsub.s32 0, %v3229
    %v3231 = vrot.slane %v3226, %v3230
    %v3232 = vlaneseq
    %v3233 = vshrl.u32 %v3232, 7
    %v3234 = vsub.s32 1, %v3233
    %v3235 = vrot.slane %v3226, %v3234
    %v3236 = vlaneseq
    %v3237 = vshrl.u32 %v3236, 7
    %v3238 = vsub.s32 2, %v3237
    %v3239 = vrot.slane %v3226, %v3238
    %v3240 = vlaneseq
    %v3241 = vshrl.u32 %v3240, 7
    %v3242 = vsub.s32 3, %v3241
    %v3243 = vrot.slane %v3226, %v3242
    %v3248 = vmul.f32 %v3186, %v3231
    %v3249 = vmul.f32 %v3187, %v3235
    %v3250 = vmul.f32 %v3188, %v3239
    %v3251 = vmul.f32 %v3189, %v3243
    %v3252 = vmul.f32 %v3190, %v3231
    %v3253 = vmul.f32 %v3191, %v3235
    %v3254 = vmul.f32 %v3192, %v3239
    %v3255 = vmul.f32 %v3193, %v3243
    %v3256 = vmul.f32 %v3194, %v3231
    %v3257 = vmul.f32 %v3195, %v3235
    %v3258 = vmul.f32 %v3196, %v3239
    %v3259 = vmul.f32 %v3197, %v3243
    %v3260 = vmul.f32 %v3198, %v3231
    %v3261 = vmul.f32 %v3199, %v3235
    %v3262 = vmul.f32 %v3200, %v3239
    %v3263 = vmul.f32 %v3201, %v3243
    %v3264 = vmul.f32 %v3202, %v3231
    %v3265 = vmul.f32 %v3203, %v3235
    %v3266 = vmul.f32 %v3204, %v3239
    %v3267 = vmul.f32 %v3205, %v3243
    %v3268 = vmul.f32 %v3206, %v3231
    %v3269 = vmul.f32 %v3207, %v3235
    %v3270 = vmul.f32 %v3208, %v3239
    %v3271 = vmul.f32 %v3209, %v3243
    %v3272 = vmul.f32 %v3210, %v3231
    %v3273 = vmul.f32 %v3211, %v3235
    %v3274 = vmul.f32 %v3212, %v3239
    %v3275 = vmul.f32 %v3213, %v3243
    %v3276 = vmul.f32 %v3214, %v3231
    %v3277 = vmul.f32 %v3215, %v3235
    %v3278 = vmul.f32 %v3216, %v3239
    %v3279 = vmul.f32 %v3217, %v3243
    %v3280 = vmul.f32 %v3218, %v3231
    %v3281 = vmul.f32 %v3219, %v3235
    %v3282 = vmul.f32 %v3220, %v3239
    %v3283 = vmul.f32 %v3221, %v3243
    %v3284 = vmul.f32 %v3222, %v3231
    %v3285 = vmul.f32 %v3223, %v3235
    %v3286 = vmul.f32 %v3224, %v3239
    %v3287 = vmul.f32 %v3225, %v3243
    %v3288 = vadd.f32 %v3248, %v3249
    %v3289 = vadd.f32 %v3288, %v3250
    %v3290 = vadd.f32 %v3289, %v3251
    %3291 = vadd.xlane.f32.xlu0 %v3290
    %v3292 = vpop.xlane.xlu0 %3291
    %v3293 = vadd.f32 %v3252, %v3253
    %v3294 = vadd.f32 %v3293, %v3254
    %v3295 = vadd.f32 %v3294, %v3255
    %3296 = vadd.xlane.f32.xlu0 %v3295
    %v3297 = vpop.xlane.xlu0 %3296
    %v3298 = vadd.f32 %v3256, %v3257
    %v3299 = vadd.f32 %v3298, %v3258
    %v3300 = vadd.f32 %v3299, %v3259
    %3301 = vadd.xlane.f32.xlu0 %v3300
    %v3302 = vpop.xlane.xlu0 %3301
    %v3303 = vadd.f32 %v3260, %v3261
    %v3304 = vadd.f32 %v3303, %v3262
    %v3305 = vadd.f32 %v3304, %v3263
    %3306 = vadd.xlane.f32.xlu0 %v3305
    %v3307 = vpop.xlane.xlu0 %3306
    %v3308 = vadd.f32 %v3264, %v3265
    %v3309 = vadd.f32 %v3308, %v3266
    %v3310 = vadd.f32 %v3309, %v3267
    %3311 = vadd.xlane.f32.xlu0 %v3310
    %v3312 = vpop.xlane.xlu0 %3311
    %v3313 = vadd.f32 %v3268, %v3269
    %v3314 = vadd.f32 %v3313, %v3270
    %v3315 = vadd.f32 %v3314, %v3271
    %3316 = vadd.xlane.f32.xlu0 %v3315
    %v3317 = vpop.xlane.xlu0 %3316
    %v3318 = vadd.f32 %v3272, %v3273
    %v3319 = vadd.f32 %v3318, %v3274
    %v3320 = vadd.f32 %v3319, %v3275
    %3321 = vadd.xlane.f32.xlu0 %v3320
    %v3322 = vpop.xlane.xlu0 %3321
    %v3323 = vadd.f32 %v3276, %v3277
    %v3324 = vadd.f32 %v3323, %v3278
    %v3325 = vadd.f32 %v3324, %v3279
    %3326 = vadd.xlane.f32.xlu0 %v3325
    %v3327 = vpop.xlane.xlu0 %3326
    %v3328 = vadd.f32 %v3280, %v3281
    %v3329 = vadd.f32 %v3328, %v3282
    %v3330 = vadd.f32 %v3329, %v3283
    %3331 = vadd.xlane.f32.xlu0 %v3330
    %v3332 = vpop.xlane.xlu0 %3331
    %v3333 = vadd.f32 %v3284, %v3285
    %v3334 = vadd.f32 %v3333, %v3286
    %v3335 = vadd.f32 %v3334, %v3287
    %3336 = vadd.xlane.f32.xlu0 %v3335
    %v3337 = vpop.xlane.xlu0 %3336
    %3338 = vxpose.xlu0.b32.start [1/16] %v3292, 128
    %3339 = vxpose.xlu0.b32.cont [2/16] %v3297, 128
    %3340 = vxpose.xlu0.b32.cont [3/16] %v3302, 128
    %3341 = vxpose.xlu0.b32.cont [4/16] %v3307, 128
    %3342 = vxpose.xlu0.b32.cont [5/16] %v3312, 128
    %3343 = vxpose.xlu0.b32.cont [6/16] %v3317, 128
    %3344 = vxpose.xlu0.b32.cont [7/16] %v3322, 128
    %3345 = vxpose.xlu0.b32.cont [8/16] %v3327, 128
    %3346 = vxpose.xlu0.b32.cont [9/16] %v3332, 128
    %3347 = vxpose.xlu0.b32.cont [10/16] %v3337, 128
    %3348 = vxpose.xlu0.b32.cont [11/16] 0.0, 128
    %3349 = vxpose.xlu0.b32.cont [12/16] 0.0, 128
    %3350 = vxpose.xlu0.b32.cont [13/16] 0.0, 128
    %3351 = vxpose.xlu0.b32.cont [14/16] 0.0, 128
    %3352 = vxpose.xlu0.b32.cont [15/16] 0.0, 128
    %3353 = vxpose.xlu0.b32.end [16/16] 0.0, 128
    %v3354 = vpop.trf.xlu0
    %v3355 = vpop.trf.xlu0
    %v3356 = vpop.trf.xlu0
    %v3357 = vpop.trf.xlu0
    %v3358 = vpop.trf.xlu0
    %v3359 = vpop.trf.xlu0
    %v3360 = vpop.trf.xlu0
    %v3361 = vpop.trf.xlu0
    %v3362 = vpop.trf.xlu0
    %v3363 = vpop.trf.xlu0
    %v3364 = vpop.trf.xlu0
    %v3365 = vpop.trf.xlu0
    %v3366 = vpop.trf.xlu0
    %v3367 = vpop.trf.xlu0
    %v3368 = vpop.trf.xlu0
    %v3369 = vpop.trf.xlu0
    %v3370 = vld [vmem:[#allocation2] sm:$0x1]
    %3372 = vset.pattern.permute.xlu0 0
    %3373 = vperm.xlu0 %3372, %v3370
    %v3374 = vpop.permute.xlu0 %3373
    %v3376 = vlaneseq
    %v3377 = vshrl.u32 %v3376, 7
    %v3378 = vsub.s32 0, %v3377
    %v3379 = vrot.slane %v3374, %v3378
    %v3380 = vadd.f32 %v3354, %v3379
    %vm3381 = vcmask 647168
    %3382 = vst.msk [vmem:[#allocation9] sm:$0x1] %vm3381, %v3380
    // Predicated region
    $region42: #{tpu_custom_call.1} parent=1 // pred_check
      _
    $region43: #{tpu_custom_call.1} parent=1 // pred_check_branch
      %3384 = sbr.rel (0) target = $region45
    $region44: #{tpu_custom_call.1} parent=1 // pred_region
      %s3386 = ssub.s32 16, 16
      %3387 = vsyncadd [#allocation5], %s3386
      %s3389 = sshll.u32 [#allocation9], 4
      %s3390 = int_to_ptr.vmem [resolvable:$true] %s3389
      %3392 = dma.vmem_to_hbm [thread:$0]  %s3390, 16, %s7, [#allocation5]
    $region45: #{tpu_custom_call.1} parent=1 // pred_fallthru
      _
    // Predicated region
    $region46: #{tpu_custom_call.1} parent=1 // pred_check
      _
    $region47: #{tpu_custom_call.1} parent=1 // pred_check_branch
      %3394 = sbr.rel (0) target = $region49
    $region48: #{tpu_custom_call.1} parent=1 // pred_region
      %3395 = dma.done [#allocation5], 16
    $region49: #{tpu_custom_call.1} parent=1 // pred_fallthru
      _
    %3396 = vsyncpa [#allocation4], 1
    %3397 = vsyncpa [#allocation7], 1
    %3398 = vsyncpa [#allocation5], 1

</llo_original>
